<compile_context>
chip_gen: v5e
topology: v5e:2x2
jax: 0.10.0
libtpu: 0.0.40
codegen_flags: <defaults>
</compile_context>

<pallas_src>
import jax
import jax.numpy as jnp
from jax.experimental import pallas as pl
from jax.experimental.pallas import tpu as pltpu


def _round_up(x, m):
    return ((x + m - 1) // m) * m


def _detector_kernel(x_ref, we_ref, be_ref, w1_ref, b1_ref, w2_ref, b2_ref,
                     o_ref, acc_ref):
    k = pl.program_id(0)

    @pl.when(k == 0)
    def _():
        acc_ref[...] = jnp.zeros_like(acc_ref)

    # Stream one K-tile of the encoder weights: acc += x_k @ W_enc_k   (f32 acc)
    acc_ref[...] += jnp.dot(x_ref[...], we_ref[...],
                            preferred_element_type=jnp.float32)

    @pl.when(k == pl.num_programs(0) - 1)
    def _():
        # Encoder stand-in epilogue: feat = relu(acc + b_enc)   -> [B_pad, size_fc]
        feat = jnp.maximum(acc_ref[...] + be_ref[...].astype(jnp.float32), 0.0)

        # fc[0] + fc[1]: h = relu(feat @ W1 + b1)                -> [B_pad, 64]
        h = jnp.dot(feat.astype(w1_ref.dtype), w1_ref[...],
                    preferred_element_type=jnp.float32)
        h = jnp.maximum(h + b1_ref[...].astype(jnp.float32), 0.0)

        # fc[2]: out = h @ W2 + b2                               -> [B_pad, 128]
        out = jnp.dot(h.astype(w2_ref.dtype), w2_ref[...],
                      preferred_element_type=jnp.float32)
        o_ref[...] = out + b2_ref[...].astype(jnp.float32)


def iodice_calcium_detector(x_nchw, params, *, tk_max=2048,
                            compute_dtype=jnp.bfloat16):
    """x_nchw: [B, C, H, W] float32.  Returns logits [B, num_out] float32."""
    B = x_nchw.shape[0]
    x_flat = x_nchw.reshape(B, -1)
    K = x_flat.shape[1]

    w_enc, b_enc, w1, b1, w2, b2 = params
    size_fc = w_enc.shape[1]
    hidden = w1.shape[1]
    num_out = w2.shape[1]

    # --- padding / tiling choices -------------------------------------------
    B_pad = _round_up(max(B, 8), 8)              # f32 sublane multiple
    size_fc_pad = _round_up(size_fc, 128)        # lane multiple
    out_pad = 128                                # lane-dense output store
    tk = min(_round_up(tk_max, 128), _round_up(K, 128))
    K_pad = _round_up(K, tk)
    num_k = K_pad // tk

    # --- cast to bf16 and zero-pad at the wrapper boundary ------------------
    cd = compute_dtype
    x_p = jnp.pad(x_flat.astype(cd), ((0, B_pad - B), (0, K_pad - K)))
    we_p = jnp.pad(w_enc.astype(cd),
                   ((0, K_pad - K), (0, size_fc_pad - size_fc)))
    be_p = jnp.pad(b_enc.astype(cd), ((0, 0), (0, size_fc_pad - size_fc)))
    w1_p = jnp.pad(w1.astype(cd), ((0, size_fc_pad - size_fc), (0, 0)))
    b1_p = b1.astype(cd)
    w2_p = jnp.pad(w2.astype(cd), ((0, 0), (0, out_pad - num_out)))
    b2_p = jnp.pad(b2.astype(cd), ((0, 0), (0, out_pad - num_out)))

    grid_spec = pltpu.PrefetchScalarGridSpec(
        num_scalar_prefetch=0,
        grid=(num_k,),
        in_specs=[
            pl.BlockSpec((B_pad, tk), lambda k: (0, k)),            # x
            pl.BlockSpec((tk, size_fc_pad), lambda k: (k, 0)),      # W_enc
            pl.BlockSpec((1, size_fc_pad), lambda k: (0, 0)),       # b_enc
            pl.BlockSpec((size_fc_pad, hidden), lambda k: (0, 0)),  # W1
            pl.BlockSpec((1, hidden), lambda k: (0, 0)),            # b1
            pl.BlockSpec((hidden, out_pad), lambda k: (0, 0)),      # W2
            pl.BlockSpec((1, out_pad), lambda k: (0, 0)),           # b2
        ],
        out_specs=pl.BlockSpec((B_pad, out_pad), lambda k: (0, 0)),
        scratch_shapes=[pltpu.VMEM((B_pad, size_fc_pad), jnp.float32)],
    )

    bytes_per_elt = jnp.dtype(cd).itemsize
    cost = pl.CostEstimate(
        flops=2 * B_pad * K_pad * size_fc_pad
              + 2 * B_pad * size_fc_pad * hidden
              + 2 * B_pad * hidden * out_pad,
        transcendentals=0,
        bytes_accessed=(B_pad * K_pad + K_pad * size_fc_pad
                        + size_fc_pad * hidden + hidden * out_pad)
                       * bytes_per_elt
                       + B_pad * out_pad * 4,
    )

    out = pl.pallas_call(
        _detector_kernel,
        out_shape=jax.ShapeDtypeStruct((B_pad, out_pad), jnp.float32),
        grid_spec=grid_spec,
        compiler_params=pltpu.CompilerParams(
            dimension_semantics=("arbitrary",),
            vmem_limit_bytes=48 * 1024 * 1024,
        ),
        cost_estimate=cost,
    )(x_p, we_p, be_p, w1_p, b1_p, w2_p, b2_p)

    return out[:B, :num_out]


def make_params(key, in_features, size_fc=1024, mode="classification"):
    """Deterministic synthetic parameters matching the module's __init__ shapes."""
    num_out = 2 if mode == "classification" else 1
    k0, k1, k2, k3, k4, k5 = jax.random.split(key, 6)
    w_enc = jax.random.normal(k0, (in_features, size_fc), jnp.float32) * 0.02
    b_enc = jax.random.normal(k1, (1, size_fc), jnp.float32) * 0.01
    w1 = jax.random.normal(k2, (size_fc, 64), jnp.float32) * 0.02
    b1 = jax.random.normal(k3, (1, 64), jnp.float32) * 0.01
    w2 = jax.random.normal(k4, (64, num_out), jnp.float32) * 0.02
    b2 = jax.random.normal(k5, (1, num_out), jnp.float32) * 0.01
    return (w_enc, b_enc, w1, b1, w2, b2)


def _reference(x_nchw, params, compute_dtype=jnp.bfloat16):
    """Pure-JAX reference using the same bf16 inputs / f32 accumulation."""
    cd = compute_dtype
    x = x_nchw.reshape(x_nchw.shape[0], -1).astype(cd)
    w_enc, b_enc, w1, b1, w2, b2 = [p.astype(cd) for p in params]
    feat = jnp.dot(x, w_enc, preferred_element_type=jnp.float32)
    feat = jnp.maximum(feat + b_enc.astype(jnp.float32), 0.0)
    h = jnp.dot(feat.astype(cd), w1, preferred_element_type=jnp.float32)
    h = jnp.maximum(h + b1.astype(jnp.float32), 0.0)
    out = jnp.dot(h.astype(cd), w2, preferred_element_type=jnp.float32)
    return out + b2.astype(jnp.float32)


if __name__ == "__main__":
    key = jax.random.PRNGKey(0)
    kx, kp = jax.random.split(key)

    B, C, H, W = 2, 4, 16, 16
    x = jax.random.normal(kx, (B, C, H, W), jnp.float32)

    params = make_params(kp, in_features=C * H * W, size_fc=1024,
                         mode="classification")

    # tk_max=512 so the toy K=1024 exercises the multi-step K-grid/accumulator
    # path (real flatten sizes use the 2048 default).
    out = iodice_calcium_detector(x, params, tk_max=512)
    out = jax.block_until_ready(out)

    ref = _reference(x, params)
    assert out.shape == (B, 2), out.shape
    assert jnp.allclose(out, ref, atol=2e-3, rtol=2e-3), (out, ref)

    print("KERNEL_OK")
</pallas_src>

<mosaic_0001>
module attributes {stable_mosaic.version = 11 : i64} {
  func.func @_detector_kernel(%arg0: i32, %arg1: memref<8x512xbf16, #tpu.memory_space<vmem>>, %arg2: memref<512x1024xbf16, #tpu.memory_space<vmem>>, %arg3: memref<1x1024xbf16, #tpu.memory_space<vmem>>, %arg4: memref<1024x64xbf16, #tpu.memory_space<vmem>>, %arg5: memref<1x64xbf16, #tpu.memory_space<vmem>>, %arg6: memref<64x128xbf16, #tpu.memory_space<vmem>>, %arg7: memref<1x128xbf16, #tpu.memory_space<vmem>>, %arg8: memref<8x128xf32, #tpu.memory_space<vmem>>, %arg9: memref<8x1024xf32, #tpu.memory_space<vmem>>) attributes {dimension_semantics = [#tpu.dimension_semantics<arbitrary>], iteration_bounds = array<i64: 2>, scalar_prefetch = 0 : i64, scratch_operands = 1 : i64, tpu.core_type = #tpu.core_type<tc>, window_params = [{transform_indices = @transform_0, window_bounds = array<i64: 8, 512>}, {transform_indices = @transform_1, window_bounds = array<i64: 512, 1024>}, {pipeline_mode = #tpu.pipeline_mode<synchronous>, transform_indices = @transform_2, window_bounds = array<i64: 1, 1024>}, {pipeline_mode = #tpu.pipeline_mode<synchronous>, transform_indices = @transform_3, window_bounds = array<i64: 1024, 64>}, {pipeline_mode = #tpu.pipeline_mode<synchronous>, transform_indices = @transform_4, window_bounds = array<i64: 1, 64>}, {pipeline_mode = #tpu.pipeline_mode<synchronous>, transform_indices = @transform_5, window_bounds = array<i64: 64, 128>}, {pipeline_mode = #tpu.pipeline_mode<synchronous>, transform_indices = @transform_6, window_bounds = array<i64: 1, 128>}, {pipeline_mode = #tpu.pipeline_mode<synchronous>, transform_indices = @transform_7, window_bounds = array<i64: 8, 128>}]} {
    %c0_i32 = arith.constant 0 : i32
    %0 = arith.cmpi eq, %arg0, %c0_i32 : i32
    %1 = arith.extui %0 : i1 to i32
    %c0_i32_0 = arith.constant 0 : i32
    %2 = arith.cmpi ne, %1, %c0_i32_0 : i32
    scf.if %2 {
      %cst_9 = arith.constant 0.000000e+00 : f32
      %12 = vector.broadcast %cst_9 : f32 to vector<8x1024xf32>
      %c0_10 = arith.constant 0 : index
      %c0_11 = arith.constant 0 : index
      %13 = vector.load %arg9[%c0_10, %c0_11] : memref<8x1024xf32, #tpu.memory_space<vmem>>, vector<8x1024xf32>
      tpu.vector_store %arg9[%c0_10, %c0_11], %12 {strides = array<i32>} : memref<8x1024xf32, #tpu.memory_space<vmem>>, vector<8x1024xf32>,
    } else {
    }
    %c0 = arith.constant 0 : index
    %c0_1 = arith.constant 0 : index
    %3 = vector.load %arg9[%c0, %c0_1] : memref<8x1024xf32, #tpu.memory_space<vmem>>, vector<8x1024xf32>
    %c0_2 = arith.constant 0 : index
    %c0_3 = arith.constant 0 : index
    %4 = vector.load %arg1[%c0_2, %c0_3] : memref<8x512xbf16, #tpu.memory_space<vmem>>, vector<8x512xbf16>
    %c0_4 = arith.constant 0 : index
    %c0_5 = arith.constant 0 : index
    %5 = vector.load %arg2[%c0_4, %c0_5] : memref<512x1024xbf16, #tpu.memory_space<vmem>>, vector<512x1024xbf16>
    %cst = arith.constant dense<0.000000e+00> : vector<8x1024xf32>
    %6 = tpu.matmul %4, %5, %cst {dimension_numbers = #tpu.dot_dimension_numbers<[1], [0], [0], [1], [0, 0, 1, 1], [], []>} : vector<8x512xbf16>, vector<512x1024xbf16>, vector<8x1024xf32> -> vector<8x1024xf32>
    %7 = arith.addf %3, %6 : vector<8x1024xf32>
    %c0_6 = arith.constant 0 : index
    %c0_7 = arith.constant 0 : index
    %8 = vector.load %arg9[%c0_6, %c0_7] : memref<8x1024xf32, #tpu.memory_space<vmem>>, vector<8x1024xf32>
    tpu.vector_store %arg9[%c0_6, %c0_7], %7 {strides = array<i32>} : memref<8x1024xf32, #tpu.memory_space<vmem>>, vector<8x1024xf32>,
    %c1_i32 = arith.constant 1 : i32
    %9 = arith.cmpi eq, %arg0, %c1_i32 : i32
    %10 = arith.extui %9 : i1 to i32
    %c0_i32_8 = arith.constant 0 : i32
    %11 = arith.cmpi ne, %10, %c0_i32_8 : i32
    scf.if %11 {
      %c0_9 = arith.constant 0 : index
      %c0_10 = arith.constant 0 : index
      %12 = vector.load %arg9[%c0_9, %c0_10] : memref<8x1024xf32, #tpu.memory_space<vmem>>, vector<8x1024xf32>
      %c0_11 = arith.constant 0 : index
      %c0_12 = arith.constant 0 : index
      %13 = vector.load %arg3[%c0_11, %c0_12] : memref<1x1024xbf16, #tpu.memory_space<vmem>>, vector<1x1024xbf16>
      %14 = arith.extf %13 : vector<1x1024xbf16> to vector<1x1024xf32>
      %15 = vector.broadcast %14 : vector<1x1024xf32> to vector<8x1024xf32>
      %16 = arith.addf %12, %15 : vector<8x1024xf32>
      %cst_13 = arith.constant 0.000000e+00 : f32
      %17 = vector.broadcast %cst_13 : f32 to vector<8x1024xf32>
      %18 = arith.maximumf %16, %17 : vector<8x1024xf32>
      %19 = arith.truncf %18 : vector<8x1024xf32> to vector<8x1024xbf16>
      %c0_14 = arith.constant 0 : index
      %c0_15 = arith.constant 0 : index
      %20 = vector.load %arg4[%c0_14, %c0_15] : memref<1024x64xbf16, #tpu.memory_space<vmem>>, vector<1024x64xbf16>
      %cst_16 = arith.constant dense<0.000000e+00> : vector<8x64xf32>
      %21 = tpu.matmul %19, %20, %cst_16 {dimension_numbers = #tpu.dot_dimension_numbers<[1], [0], [0], [1], [0, 0, 1, 1], [], []>} : vector<8x1024xbf16>, vector<1024x64xbf16>, vector<8x64xf32> -> vector<8x64xf32>
      %c0_17 = arith.constant 0 : index
      %c0_18 = arith.constant 0 : index
      %22 = vector.load %arg5[%c0_17, %c0_18] : memref<1x64xbf16, #tpu.memory_space<vmem>>, vector<1x64xbf16>
      %23 = arith.extf %22 : vector<1x64xbf16> to vector<1x64xf32>
      %24 = vector.broadcast %23 : vector<1x64xf32> to vector<8x64xf32>
      %25 = arith.addf %21, %24 : vector<8x64xf32>
      %cst_19 = arith.constant 0.000000e+00 : f32
      %26 = vector.broadcast %cst_19 : f32 to vector<8x64xf32>
      %27 = arith.maximumf %25, %26 : vector<8x64xf32>
      %28 = arith.truncf %27 : vector<8x64xf32> to vector<8x64xbf16>
      %c0_20 = arith.constant 0 : index
      %c0_21 = arith.constant 0 : index
      %29 = vector.load %arg6[%c0_20, %c0_21] : memref<64x128xbf16, #tpu.memory_space<vmem>>, vector<64x128xbf16>
      %cst_22 = arith.constant dense<0.000000e+00> : vector<8x128xf32>
      %30 = tpu.matmul %28, %29, %cst_22 {dimension_numbers = #tpu.dot_dimension_numbers<[1], [0], [0], [1], [0, 0, 1, 1], [], []>} : vector<8x64xbf16>, vector<64x128xbf16>, vector<8x128xf32> -> vector<8x128xf32>
      %c0_23 = arith.constant 0 : index
      %c0_24 = arith.constant 0 : index
      %31 = vector.load %arg7[%c0_23, %c0_24] : memref<1x128xbf16, #tpu.memory_space<vmem>>, vector<1x128xbf16>
      %32 = arith.extf %31 : vector<1x128xbf16> to vector<1x128xf32>
      %33 = vector.broadcast %32 : vector<1x128xf32> to vector<8x128xf32>
      %34 = arith.addf %30, %33 : vector<8x128xf32>
      %c0_25 = arith.constant 0 : index
      %c0_26 = arith.constant 0 : index
      %35 = vector.load %arg8[%c0_25, %c0_26] : memref<8x128xf32, #tpu.memory_space<vmem>>, vector<8x128xf32>
      tpu.vector_store %arg8[%c0_25, %c0_26], %34 {strides = array<i32>} : memref<8x128xf32, #tpu.memory_space<vmem>>, vector<8x128xf32>,
    } else {
    }
    return
  }
  func.func @transform_0(%arg0: i32) -> (i32, i32) {
    %c0_i32 = arith.constant 0 : i32
    %c0_i32_0 = arith.constant 0 : i32
    return %c0_i32, %arg0 : i32, i32
  }
  func.func @transform_1(%arg0: i32) -> (i32, i32) {
    %c0_i32 = arith.constant 0 : i32
    %c0_i32_0 = arith.constant 0 : i32
    return %arg0, %c0_i32 : i32, i32
  }
  func.func @transform_2(%arg0: i32) -> (i32, i32) {
    %c0_i32 = arith.constant 0 : i32
    %c0_i32_0 = arith.constant 0 : i32
    %c0_i32_1 = arith.constant 0 : i32
    return %c0_i32, %c0_i32_0 : i32, i32
  }
  func.func @transform_3(%arg0: i32) -> (i32, i32) {
    %c0_i32 = arith.constant 0 : i32
    %c0_i32_0 = arith.constant 0 : i32
    %c0_i32_1 = arith.constant 0 : i32
    return %c0_i32, %c0_i32_0 : i32, i32
  }
  func.func @transform_4(%arg0: i32) -> (i32, i32) {
    %c0_i32 = arith.constant 0 : i32
    %c0_i32_0 = arith.constant 0 : i32
    %c0_i32_1 = arith.constant 0 : i32
    return %c0_i32, %c0_i32_0 : i32, i32
  }
  func.func @transform_5(%arg0: i32) -> (i32, i32) {
    %c0_i32 = arith.constant 0 : i32
    %c0_i32_0 = arith.constant 0 : i32
    %c0_i32_1 = arith.constant 0 : i32
    return %c0_i32, %c0_i32_0 : i32, i32
  }
  func.func @transform_6(%arg0: i32) -> (i32, i32) {
    %c0_i32 = arith.constant 0 : i32
    %c0_i32_0 = arith.constant 0 : i32
    %c0_i32_1 = arith.constant 0 : i32
    return %c0_i32, %c0_i32_0 : i32, i32
  }
  func.func @transform_7(%arg0: i32) -> (i32, i32) {
    %c0_i32 = arith.constant 0 : i32
    %c0_i32_0 = arith.constant 0 : i32
    %c0_i32_1 = arith.constant 0 : i32
    return %c0_i32, %c0_i32_0 : i32, i32
  }
}

</mosaic_0001>

<llo_original>
// kernel: tpu_custom_call.1
$region0: #{tpu_custom_call.1}
  #allocation0 [shape = 'u32[]', space=smem, size = 0x4, offset = 0x4, fixed_abs, tag = 'smem constant byte address 0x4 - core index']
  #allocation1 [shape = 'u32[72,128]{1,0:T(1,128)}', space=vmem, size = 0x9000, scoped, tag = 'internal scratch']
  #allocation2 [shape = 'f32[8,1024]{1,0:T(8,128)}', space=vmem, size = 0x8000, scoped, tag = 'scratch operand']
  %s0 = inlined_call_operand.hbm [shape: bf16[8,1024], index: 0, kind: input, shape index: {}]
  %s1 = inlined_call_operand.hbm [shape: bf16[1024,1024], index: 1, kind: input, shape index: {}]
  %s2 = inlined_call_operand.hbm [shape: bf16[1,1024], index: 2, kind: input, shape index: {}]
  %s3 = inlined_call_operand.vmem [shape: bf16[1024,64], index: 3, kind: input, shape index: {}]
  %s4 = inlined_call_operand.hbm [shape: bf16[1,64], index: 4, kind: input, shape index: {}]
  %s5 = inlined_call_operand.hbm [shape: bf16[64,128], index: 5, kind: input, shape index: {}]
  %s6 = inlined_call_operand.hbm [shape: bf16[1,128], index: 6, kind: input, shape index: {}]
  %s7 = inlined_call_operand.hbm [shape: f32[8,128], index: 7, kind: output, shape index: {}]
  %s8 = sld [smem:[#allocation0]]
  $region93: #{tpu_custom_call.1} parent=0
    _
  %s10 = ssub.s32 1, %s8
  %s11 = scalar_select 0, %s10, %s8
  $region1: #{tpu_custom_call.1} parent=0
    #allocation3 [shape = 'u8[16384]{0}', space=vmem, size = 0x4000, scoped, tag = 'input window, operand 0']
    #allocation4 [shape = 's32[2]{0}', space=sflag, size = 0x8, scoped, tag = 'scoped memory for tpu_custom_call.1']
    #allocation5 [shape = 's32[2]{0}', space=sflag, size = 0x8, scoped, tag = 'scoped memory for tpu_custom_call.1']
    #allocation6 [shape = 'u8[2097152]{0}', space=vmem, size = 0x200000, scoped, tag = 'input window, operand 1']
    #allocation7 [shape = 's32[2]{0}', space=sflag, size = 0x8, scoped, tag = 'scoped memory for tpu_custom_call.1']
    #allocation8 [shape = 'u8[4096]{0}', space=vmem, size = 0x1000, scoped, tag = 'input window, operand 2, single buffered']
    #allocation9 [shape = 'u8[512]{0}', space=vmem, size = 0x400, scoped, tag = 'input window, operand 4, single buffered']
    #allocation10 [shape = 's32[1]{0}', space=sflag, size = 0x4, scoped, tag = 'scoped memory for tpu_custom_call.1']
    #allocation11 [shape = 'u8[16384]{0}', space=vmem, size = 0x4000, scoped, tag = 'input window, operand 5, single buffered']
    #allocation12 [shape = 'u8[512]{0}', space=vmem, size = 0x400, scoped, tag = 'input window, operand 6, single buffered']
    #allocation13 [shape = 's32[1]{0}', space=sflag, size = 0x4, scoped, tag = 'scoped memory for tpu_custom_call.1']
    #allocation14 [shape = 'u8[4096]{0}', space=vmem, size = 0x1000, scoped, tag = 'output window, operand 0, single buffered']
    %12 = vsyncpa [#allocation4], 0
    %s13 = scalar_lea.sflag [#allocation4], 1
    %14 = vsyncpa %s13, 0
    %15 = vsyncpa [#allocation7], 0
    %s16 = scalar_lea.sflag [#allocation7], 1
    %17 = vsyncpa %s16, 0
    %18 = vsyncpa [#allocation10], 0
    %19 = vsyncpa [#allocation13], 0
    %20 = vsyncpa [#allocation5], 0
    loop: start=0, step=1, limit=4
    $region2: #{tpu_custom_call.1} parent=1 // loop_pre_header
      _
    $region3: #{tpu_custom_call.1} parent=1 // loop_header
      %s22 = sphi 0, %s26
      %p23 = scmp.ge.s32.totalorder %s22, 4
      %s32 = sphi 0, %s34
      %s35 = sphi 0, %s32
      %s36 = sphi 0, %s35
      %s52 = sphi 0, %s36
      %s58 = sphi 0, %s60
      %s61 = sphi 0, %s58
      %s62 = sphi 0, %s61
      %s78 = sphi 0, %s62
      %s82 = sphi 0, %s82
      %s84 = sphi 0, %s82
      %s85 = sphi 0, %s84
      %s99 = sphi 0, %s85
      %s103 = sphi 0, %s103
      %s105 = sphi 0, %s103
      %s106 = sphi 0, %s105
      %s120 = sphi 0, %s106
      %s124 = sphi 0, %s124
      %s126 = sphi 0, %s124
      %s127 = sphi 0, %s126
      %s141 = sphi 0, %s127
      %s145 = sphi 0, %s145
      %s147 = sphi 0, %s145
      %s148 = sphi 0, %s147
      %s162 = sphi 0, %s148
      %s166 = sphi 0, %s166
      %s168 = sphi 0, %s166
      %s169 = sphi 0, %s168
      %s183 = sphi 0, %s169
      %s187 = sphi 0, %s187
      %s189 = sphi 0, %s187
      %s190 = sphi 0, %s189
      %s204 = sphi 0, %s190
    $region4: #{tpu_custom_call.1} parent=1 // loop_header_branch
      %25 = sbr.rel (%p23) target = $region8
    $region5: #{tpu_custom_call.1} parent=1 // loop_body
      %s27 = ssub.s32 %s22, 1
      %s28 = ssub.s32 %s22, 2
      %s29 = sadd.s32 %s22, 1
      %s30 = ssub.s32 %s22, %s29
      %p31 = scmp.eq.s32.totalorder %s30, 0
      %s33 = sadd.s32 %s32, 1
      %s34 = scalar_select %p31, %s32, %s33
      %p37 = pneg %p31
      %p38 = scmp.eq.s32.totalorder %s22, 1
      %p39 = por %p37, %p38
      %p40 = scmp.ne.s32.totalorder %s32, %s35
      %p41 = scmp.eq.s32.totalorder %s22, 0
      %p42 = por %p40, %p41
      %p43 = scmp.ne.s32.totalorder %s32, %s35
      %p44 = scmp.eq.s32.totalorder %s27, 1
      %p45 = por %p43, %p44
      %p46 = scmp.ne.s32.totalorder %s35, %s36
      %p47 = scmp.eq.s32.totalorder %s27, 0
      %p48 = por %p46, %p47
      %p49 = scmp.ne.s32.totalorder %s35, %s36
      %p50 = scmp.eq.s32.totalorder %s28, 1
      %p51 = por %p49, %p50
      %p53 = scmp.ne.s32.totalorder %s36, %s52
      %p54 = scmp.eq.s32.totalorder %s28, 0
      %p55 = por %p53, %p54
      %s56 = ssub.s32 %s22, %s29
      %p57 = scmp.eq.s32.totalorder %s56, 0
      %s59 = sadd.s32 %s58, 1
      %s60 = scalar_select %p57, %s58, %s59
      %p63 = pneg %p57
      %p64 = scmp.eq.s32.totalorder %s22, 1
      %p65 = por %p63, %p64
      %p66 = scmp.ne.s32.totalorder %s58, %s61
      %p67 = scmp.eq.s32.totalorder %s22, 0
      %p68 = por %p66, %p67
      %p69 = scmp.ne.s32.totalorder %s58, %s61
      %p70 = scmp.eq.s32.totalorder %s27, 1
      %p71 = por %p69, %p70
      %p72 = scmp.ne.s32.totalorder %s61, %s62
      %p73 = scmp.eq.s32.totalorder %s27, 0
      %p74 = por %p72, %p73
      %p75 = scmp.ne.s32.totalorder %s61, %s62
      %p76 = scmp.eq.s32.totalorder %s28, 1
      %p77 = por %p75, %p76
      %p79 = scmp.ne.s32.totalorder %s62, %s78
      %p80 = scmp.eq.s32.totalorder %s28, 0
      %p81 = por %p79, %p80
      %s83 = sadd.s32 %s82, 1
      %p86 = scmp.eq.s32.totalorder %s22, 1
      %p87 = scmp.ne.s32.totalorder %s82, %s84
      %p88 = scmp.eq.s32.totalorder %s22, 0
      %p89 = por %p87, %p88
      %p90 = scmp.ne.s32.totalorder %s82, %s84
      %p91 = scmp.eq.s32.totalorder %s27, 1
      %p92 = por %p90, %p91
      %p93 = scmp.ne.s32.totalorder %s84, %s85
      %p94 = scmp.eq.s32.totalorder %s27, 0
      %p95 = por %p93, %p94
      %p96 = scmp.ne.s32.totalorder %s84, %s85
      %p97 = scmp.eq.s32.totalorder %s28, 1
      %p98 = por %p96, %p97
      %p100 = scmp.ne.s32.totalorder %s85, %s99
      %p101 = scmp.eq.s32.totalorder %s28, 0
      %p102 = por %p100, %p101
      %s104 = sadd.s32 %s103, 1
      %p107 = scmp.eq.s32.totalorder %s22, 1
      %p108 = scmp.ne.s32.totalorder %s103, %s105
      %p109 = scmp.eq.s32.totalorder %s22, 0
      %p110 = por %p108, %p109
      %p111 = scmp.ne.s32.totalorder %s103, %s105
      %p112 = scmp.eq.s32.totalorder %s27, 1
      %p113 = por %p111, %p112
      %p114 = scmp.ne.s32.totalorder %s105, %s106
      %p115 = scmp.eq.s32.totalorder %s27, 0
      %p116 = por %p114, %p115
      %p117 = scmp.ne.s32.totalorder %s105, %s106
      %p118 = scmp.eq.s32.totalorder %s28, 1
      %p119 = por %p117, %p118
      %p121 = scmp.ne.s32.totalorder %s106, %s120
      %p122 = scmp.eq.s32.totalorder %s28, 0
      %p123 = por %p121, %p122
      %s125 = sadd.s32 %s124, 1
      %p128 = scmp.eq.s32.totalorder %s22, 1
      %p129 = scmp.ne.s32.totalorder %s124, %s126
      %p130 = scmp.eq.s32.totalorder %s22, 0
      %p131 = por %p129, %p130
      %p132 = scmp.ne.s32.totalorder %s124, %s126
      %p133 = scmp.eq.s32.totalorder %s27, 1
      %p134 = por %p132, %p133
      %p135 = scmp.ne.s32.totalorder %s126, %s127
      %p136 = scmp.eq.s32.totalorder %s27, 0
      %p137 = por %p135, %p136
      %p138 = scmp.ne.s32.totalorder %s126, %s127
      %p139 = scmp.eq.s32.totalorder %s28, 1
      %p140 = por %p138, %p139
      %p142 = scmp.ne.s32.totalorder %s127, %s141
      %p143 = scmp.eq.s32.totalorder %s28, 0
      %p144 = por %p142, %p143
      %s146 = sadd.s32 %s145, 1
      %p149 = scmp.eq.s32.totalorder %s22, 1
      %p150 = scmp.ne.s32.totalorder %s145, %s147
      %p151 = scmp.eq.s32.totalorder %s22, 0
      %p152 = por %p150, %p151
      %p153 = scmp.ne.s32.totalorder %s145, %s147
      %p154 = scmp.eq.s32.totalorder %s27, 1
      %p155 = por %p153, %p154
      %p156 = scmp.ne.s32.totalorder %s147, %s148
      %p157 = scmp.eq.s32.totalorder %s27, 0
      %p158 = por %p156, %p157
      %p159 = scmp.ne.s32.totalorder %s147, %s148
      %p160 = scmp.eq.s32.totalorder %s28, 1
      %p161 = por %p159, %p160
      %p163 = scmp.ne.s32.totalorder %s148, %s162
      %p164 = scmp.eq.s32.totalorder %s28, 0
      %p165 = por %p163, %p164
      %s167 = sadd.s32 %s166, 1
      %p170 = scmp.eq.s32.totalorder %s22, 1
      %p171 = scmp.ne.s32.totalorder %s166, %s168
      %p172 = scmp.eq.s32.totalorder %s22, 0
      %p173 = por %p171, %p172
      %p174 = scmp.ne.s32.totalorder %s166, %s168
      %p175 = scmp.eq.s32.totalorder %s27, 1
      %p176 = por %p174, %p175
      %p177 = scmp.ne.s32.totalorder %s168, %s169
      %p178 = scmp.eq.s32.totalorder %s27, 0
      %p179 = por %p177, %p178
      %p180 = scmp.ne.s32.totalorder %s168, %s169
      %p181 = scmp.eq.s32.totalorder %s28, 1
      %p182 = por %p180, %p181
      %p184 = scmp.ne.s32.totalorder %s169, %s183
      %p185 = scmp.eq.s32.totalorder %s28, 0
      %p186 = por %p184, %p185
      %s188 = sadd.s32 %s187, 1
      %p191 = scmp.eq.s32.totalorder %s22, 1
      %p192 = scmp.ne.s32.totalorder %s187, %s189
      %p193 = scmp.eq.s32.totalorder %s22, 0
      %p194 = por %p192, %p193
      %p195 = scmp.ne.s32.totalorder %s187, %s189
      %p196 = scmp.eq.s32.totalorder %s27, 1
      %p197 = por %p195, %p196
      %p198 = scmp.ne.s32.totalorder %s189, %s190
      %p199 = scmp.eq.s32.totalorder %s27, 0
      %p200 = por %p198, %p199
      %p201 = scmp.ne.s32.totalorder %s189, %s190
      %p202 = scmp.eq.s32.totalorder %s28, 1
      %p203 = por %p201, %p202
      %p205 = scmp.ne.s32.totalorder %s190, %s204
      %p206 = scmp.eq.s32.totalorder %s28, 0
      %p207 = por %p205, %p206
      %p208 = scmp.le.s32.totalorder 1, %s22
      %p209 = scmp.lt.s32.totalorder %s22, 3
      %p210 = pnand %p208, %p209
      %p211 = pneg %p210
      // Predicated region
      $region9: #{tpu_custom_call.1} parent=5 // pred_check
        _
      $region10: #{tpu_custom_call.1} parent=5 // pred_check_branch
        %213 = sbr.rel (%p210) target = $region12
      $region11: #{tpu_custom_call.1} parent=5 // pred_region
        %s214 = ssub.s32 %s22, 1
        // Predicated region
        $region13: #{tpu_custom_call.1} parent=11 // pred_check
          %p215 = pneg %p95
        $region14: #{tpu_custom_call.1} parent=11 // pred_check_branch
          %217 = sbr.rel (%p215) target = $region16
        $region15: #{tpu_custom_call.1} parent=11 // pred_region
          %219 = vsyncadd [#allocation7], 0
          %s221 = sshll.u32 %s2, 4
          %s222 = int_to_ptr.hbm [resolvable:$true] %s221
          %s223 = sshll.u32 [#allocation8], 4
          %s224 = int_to_ptr.vmem [resolvable:$true] %s223
          %226 = dma.hbm_to_vmem [thread:$0]  %s222, 128, %s224, [#allocation7]
        $region16: #{tpu_custom_call.1} parent=11 // pred_fallthru
          _
        // Predicated region
        $region17: #{tpu_custom_call.1} parent=11 // pred_check
          %p227 = pneg %p116
        $region18: #{tpu_custom_call.1} parent=11 // pred_check_branch
          %229 = sbr.rel (%p227) target = $region20
        $region19: #{tpu_custom_call.1} parent=11 // pred_region
          _
        $region20: #{tpu_custom_call.1} parent=11 // pred_fallthru
          _
        // Predicated region
        $region21: #{tpu_custom_call.1} parent=11 // pred_check
          %p230 = pneg %p137
        $region22: #{tpu_custom_call.1} parent=11 // pred_check_branch
          %232 = sbr.rel (%p230) target = $region24
        $region23: #{tpu_custom_call.1} parent=11 // pred_region
          %234 = vsyncadd [#allocation10], 0
          %s236 = sshll.u32 %s4, 4
          %s237 = int_to_ptr.hbm [resolvable:$true] %s236
          %s238 = sshll.u32 [#allocation9], 4
          %s239 = int_to_ptr.vmem [resolvable:$true] %s238
          %241 = dma.hbm_to_vmem [thread:$0]  %s237, 16, %s239, [#allocation10]
        $region24: #{tpu_custom_call.1} parent=11 // pred_fallthru
          _
        // Predicated region
        $region25: #{tpu_custom_call.1} parent=11 // pred_check
          %p242 = pneg %p158
        $region26: #{tpu_custom_call.1} parent=11 // pred_check_branch
          %244 = sbr.rel (%p242) target = $region28
        $region27: #{tpu_custom_call.1} parent=11 // pred_region
          %246 = vsyncadd [#allocation10], 0
          %s247 = sshll.u32 %s5, 4
          %s248 = int_to_ptr.hbm [resolvable:$true] %s247
          %s249 = sshll.u32 [#allocation11], 4
          %s250 = int_to_ptr.vmem [resolvable:$true] %s249
          %255 = dma.hbm_to_vmem [thread:$0]  %s248, 512, %s250, [#allocation10], 64, 64, 4
        $region28: #{tpu_custom_call.1} parent=11 // pred_fallthru
          _
        // Predicated region
        $region29: #{tpu_custom_call.1} parent=11 // pred_check
          %p256 = pneg %p179
        $region30: #{tpu_custom_call.1} parent=11 // pred_check_branch
          %258 = sbr.rel (%p256) target = $region32
        $region31: #{tpu_custom_call.1} parent=11 // pred_region
          %260 = vsyncadd [#allocation13], 0
          %s262 = sshll.u32 %s6, 4
          %s263 = int_to_ptr.hbm [resolvable:$true] %s262
          %s264 = sshll.u32 [#allocation12], 4
          %s265 = int_to_ptr.vmem [resolvable:$true] %s264
          %267 = dma.hbm_to_vmem [thread:$0]  %s263, 16, %s265, [#allocation13]
        $region32: #{tpu_custom_call.1} parent=11 // pred_fallthru
          _
      $region12: #{tpu_custom_call.1} parent=5 // pred_fallthru
        _
      %p268 = scmp.lt.s32.totalorder %s22, 2
      // Predicated region
      $region33: #{tpu_custom_call.1} parent=5 // pred_check
        %p269 = pneg %p268
      $region34: #{tpu_custom_call.1} parent=5 // pred_check_branch
        %271 = sbr.rel (%p269) target = $region36
      $region35: #{tpu_custom_call.1} parent=5 // pred_region
        // Predicated region
        $region37: #{tpu_custom_call.1} parent=35 // pred_check
          %p272 = pneg %p42
        $region38: #{tpu_custom_call.1} parent=35 // pred_check_branch
          %274 = sbr.rel (%p272) target = $region40
        $region39: #{tpu_custom_call.1} parent=35 // pred_region
          %s275 = sand.u32 %s32, 1
          %s276 = scalar_lea.sflag [#allocation4], %s275
          %s277 = sand.u32 %s32, 1
          %s278 = smul.addr %s277, 16
          %s279 = scalar_lea.vmem [#allocation3], %s278
          %s280 = smul.u32 4, %s22
          %282 = vsyncadd %s276, 0
          %s283 = smul.addr %s280, 4
          %s284 = scalar_lea.hbm %s0, %s283
          %s286 = sshll.u32 %s284, 4
          %s287 = int_to_ptr.hbm [resolvable:$true] %s286
          %s288 = sshll.u32 %s279, 4
          %s289 = int_to_ptr.vmem [resolvable:$true] %s288
          %291 = dma.hbm_to_vmem [thread:$0]  %s287, 256, %s289, %s276
        $region40: #{tpu_custom_call.1} parent=35 // pred_fallthru
          _
        // Predicated region
        $region41: #{tpu_custom_call.1} parent=35 // pred_check
          %p292 = pneg %p68
        $region42: #{tpu_custom_call.1} parent=35 // pred_check_branch
          %294 = sbr.rel (%p292) target = $region44
        $region43: #{tpu_custom_call.1} parent=35 // pred_region
          %s295 = sand.u32 %s22, 1
          %s296 = scalar_lea.sflag [#allocation7], %s295
          %s297 = sand.u32 %s58, 1
          %s298 = smul.addr %s297, 2048
          %s299 = scalar_lea.vmem [#allocation6], %s298
          %s300 = smul.u32 64, %s22
          %302 = vsyncadd %s296, 0
          %s303 = smul.addr %s300, 8
          %s304 = smul.addr %s303, 4
          %s305 = scalar_lea.hbm %s1, %s304
          %s306 = sshll.u32 %s305, 4
          %s307 = int_to_ptr.hbm [resolvable:$true] %s306
          %s308 = sshll.u32 %s299, 4
          %s309 = int_to_ptr.vmem [resolvable:$true] %s308
          %314 = dma.hbm_to_vmem [thread:$0]  %s307, 32768, %s309, %s296, 512, 512, 32
        $region44: #{tpu_custom_call.1} parent=35 // pred_fallthru
          _
      $region36: #{tpu_custom_call.1} parent=5 // pred_fallthru
        _
      %p315 = scmp.le.s32.totalorder 1, %s22
      %p316 = scmp.lt.s32.totalorder %s22, 3
      %p317 = pnand %p315, %p316
      %p318 = pneg %p317
      // Predicated region
      $region45: #{tpu_custom_call.1} parent=5 // pred_check
        _
      $region46: #{tpu_custom_call.1} parent=5 // pred_check_branch
        %320 = sbr.rel (%p317) target = $region48
      $region47: #{tpu_custom_call.1} parent=5 // pred_region
        %s321 = ssub.s32 %s22, 1
        %s322 = sand.u32 %s35, 1
        %s323 = scalar_lea.sflag [#allocation4], %s322
        %s324 = sand.u32 %s35, 1
        %s325 = smul.addr %s324, 16
        %s326 = scalar_lea.vmem [#allocation3], %s325
        // Predicated region
        $region49: #{tpu_custom_call.1} parent=47 // pred_check
          %p327 = pneg %p48
        $region50: #{tpu_custom_call.1} parent=47 // pred_check_branch
          %329 = sbr.rel (%p327) target = $region52
        $region51: #{tpu_custom_call.1} parent=47 // pred_region
          %331 = dma.done %s323, 256
        $region52: #{tpu_custom_call.1} parent=47 // pred_fallthru
          _
        %s332 = sand.u32 %s27, 1
        %s333 = scalar_lea.sflag [#allocation7], %s332
        %s334 = sand.u32 %s61, 1
        %s335 = smul.addr %s334, 2048
        %s336 = scalar_lea.vmem [#allocation6], %s335
        // Predicated region
        $region53: #{tpu_custom_call.1} parent=47 // pred_check
          %p337 = pneg %p74
        $region54: #{tpu_custom_call.1} parent=47 // pred_check_branch
          %339 = sbr.rel (%p337) target = $region56
        $region55: #{tpu_custom_call.1} parent=47 // pred_region
          %341 = dma.done %s333, 32768
        $region56: #{tpu_custom_call.1} parent=47 // pred_fallthru
          _
        // Predicated region
        $region57: #{tpu_custom_call.1} parent=47 // pred_check
          %p342 = pneg %p95
        $region58: #{tpu_custom_call.1} parent=47 // pred_check_branch
          %344 = sbr.rel (%p342) target = $region60
        $region59: #{tpu_custom_call.1} parent=47 // pred_region
          %346 = dma.done [#allocation7], 128
        $region60: #{tpu_custom_call.1} parent=47 // pred_fallthru
          _
        // Predicated region
        $region61: #{tpu_custom_call.1} parent=47 // pred_check
          %p347 = pneg %p137
        $region62: #{tpu_custom_call.1} parent=47 // pred_check_branch
          %349 = sbr.rel (%p347) target = $region64
        $region63: #{tpu_custom_call.1} parent=47 // pred_region
          %351 = dma.done [#allocation10], 16
        $region64: #{tpu_custom_call.1} parent=47 // pred_fallthru
          _
        // Predicated region
        $region65: #{tpu_custom_call.1} parent=47 // pred_check
          %p352 = pneg %p158
        $region66: #{tpu_custom_call.1} parent=47 // pred_check_branch
          %354 = sbr.rel (%p352) target = $region68
        $region67: #{tpu_custom_call.1} parent=47 // pred_region
          %356 = dma.done [#allocation10], 512
        $region68: #{tpu_custom_call.1} parent=47 // pred_fallthru
          _
        // Predicated region
        $region69: #{tpu_custom_call.1} parent=47 // pred_check
          %p357 = pneg %p179
        $region70: #{tpu_custom_call.1} parent=47 // pred_check_branch
          %359 = sbr.rel (%p357) target = $region72
        $region71: #{tpu_custom_call.1} parent=47 // pred_region
          %361 = dma.done [#allocation13], 16
        $region72: #{tpu_custom_call.1} parent=47 // pred_fallthru
          _
        %s362 = sand.u32 %s35, 1
        %s363 = scalar_lea.sflag [#allocation4], %s362
        %s364 = sand.u32 %s35, 1
        %s365 = smul.addr %s364, 16
        %s366 = scalar_lea.vmem [#allocation3], %s365
        %p367 = pneg %p48
        %p368 = pneg %p45
        %s369 = sand.u32 %s27, 1
        %s370 = scalar_lea.sflag [#allocation7], %s369
        %s371 = sand.u32 %s61, 1
        %s372 = smul.addr %s371, 2048
        %s373 = scalar_lea.vmem [#allocation6], %s372
        %p374 = pneg %p74
        %p375 = pneg %p71
        %p376 = pneg %p95
        %p377 = pneg %p92
        %p378 = pneg %p116
        %p379 = pneg %p113
        %p380 = pneg %p137
        %p381 = pneg %p134
        %p382 = pneg %p158
        %p383 = pneg %p155
        %p384 = pneg %p179
        %p385 = pneg %p176
        %p386 = pneg %p200
        %p387 = pneg %p197
        %s388 = smul.u32 4, %s27
        %s389 = smul.u32 64, %s27
        %p391 = scmp.eq.s32.totalorder %s27, 0
        // Predicated region
        $region73: #{tpu_custom_call.1} parent=47 // pred_check
          %p392 = pneg %p391
        $region74: #{tpu_custom_call.1} parent=47 // pred_check_branch
          %394 = sbr.rel (%p392) target = $region76
        $region75: #{tpu_custom_call.1} parent=47 // pred_region
          %395 = vst [vmem:[#allocation2] sm:$0xff] 0.0
          %396 = vst [vmem:[#allocation2 + $0x8] sm:$0xff] 0.0
          %397 = vst [vmem:[#allocation2 + $0x10] sm:$0xff] 0.0
          %398 = vst [vmem:[#allocation2 + $0x18] sm:$0xff] 0.0
          %399 = vst [vmem:[#allocation2 + $0x20] sm:$0xff] 0.0
          %400 = vst [vmem:[#allocation2 + $0x28] sm:$0xff] 0.0
          %401 = vst [vmem:[#allocation2 + $0x30] sm:$0xff] 0.0
          %402 = vst [vmem:[#allocation2 + $0x38] sm:$0xff] 0.0
        $region76: #{tpu_custom_call.1} parent=47 // pred_fallthru
          _
        %v403 = vld [vmem:[#allocation2] sm:$0xff]
        %v404 = vld [vmem:[#allocation2 + $0x8] sm:$0xff]
        %v405 = vld [vmem:[#allocation2 + $0x10] sm:$0xff]
        %v406 = vld [vmem:[#allocation2 + $0x18] sm:$0xff]
        %v407 = vld [vmem:[#allocation2 + $0x20] sm:$0xff]
        %v408 = vld [vmem:[#allocation2 + $0x28] sm:$0xff]
        %v409 = vld [vmem:[#allocation2 + $0x30] sm:$0xff]
        %v410 = vld [vmem:[#allocation2 + $0x38] sm:$0xff]
        %v411 = vld [vmem:[%s326] sm:$0xff]
        %v412 = vld [vmem:[%s326 + $0x8] sm:$0xff]
        %v413 = vld [vmem:[%s336] sm:$0xff]
        %v414 = vld [vmem:[%s336 + $0x8] sm:$0xff]
        %v415 = vld [vmem:[%s336 + $0x10] sm:$0xff]
        %v416 = vld [vmem:[%s336 + $0x18] sm:$0xff]
        %v417 = vld [vmem:[%s336 + $0x20] sm:$0xff]
        %v418 = vld [vmem:[%s336 + $0x28] sm:$0xff]
        %v419 = vld [vmem:[%s336 + $0x30] sm:$0xff]
        %v420 = vld [vmem:[%s336 + $0x38] sm:$0xff]
        %v421 = vld [vmem:[%s336 + $0x40] sm:$0xff]
        %v422 = vld [vmem:[%s336 + $0x48] sm:$0xff]
        %v423 = vld [vmem:[%s336 + $0x50] sm:$0xff]
        %v424 = vld [vmem:[%s336 + $0x58] sm:$0xff]
        %v425 = vld [vmem:[%s336 + $0x60] sm:$0xff]
        %v426 = vld [vmem:[%s336 + $0x68] sm:$0xff]
        %v427 = vld [vmem:[%s336 + $0x70] sm:$0xff]
        %v428 = vld [vmem:[%s336 + $0x78] sm:$0xff]
        %v429 = vld [vmem:[%s336 + $0x80] sm:$0xff]
        %v430 = vld [vmem:[%s336 + $0x88] sm:$0xff]
        %v431 = vld [vmem:[%s336 + $0x90] sm:$0xff]
        %v432 = vld [vmem:[%s336 + $0x98] sm:$0xff]
        %v433 = vld [vmem:[%s336 + $0xa0] sm:$0xff]
        %v434 = vld [vmem:[%s336 + $0xa8] sm:$0xff]
        %v435 = vld [vmem:[%s336 + $0xb0] sm:$0xff]
        %v436 = vld [vmem:[%s336 + $0xb8] sm:$0xff]
        %v437 = vld [vmem:[%s336 + $0xc0] sm:$0xff]
        %v438 = vld [vmem:[%s336 + $0xc8] sm:$0xff]
        %v439 = vld [vmem:[%s336 + $0xd0] sm:$0xff]
        %v440 = vld [vmem:[%s336 + $0xd8] sm:$0xff]
        %v441 = vld [vmem:[%s336 + $0xe0] sm:$0xff]
        %v442 = vld [vmem:[%s336 + $0xe8] sm:$0xff]
        %v443 = vld [vmem:[%s336 + $0xf0] sm:$0xff]
        %v444 = vld [vmem:[%s336 + $0xf8] sm:$0xff]
        %v445 = vld [vmem:[%s336 + $0x100] sm:$0xff]
        %v446 = vld [vmem:[%s336 + $0x108] sm:$0xff]
        %v447 = vld [vmem:[%s336 + $0x110] sm:$0xff]
        %v448 = vld [vmem:[%s336 + $0x118] sm:$0xff]
        %v449 = vld [vmem:[%s336 + $0x120] sm:$0xff]
        %v450 = vld [vmem:[%s336 + $0x128] sm:$0xff]
        %v451 = vld [vmem:[%s336 + $0x130] sm:$0xff]
        %v452 = vld [vmem:[%s336 + $0x138] sm:$0xff]
        %v453 = vld [vmem:[%s336 + $0x140] sm:$0xff]
        %v454 = vld [vmem:[%s336 + $0x148] sm:$0xff]
        %v455 = vld [vmem:[%s336 + $0x150] sm:$0xff]
        %v456 = vld [vmem:[%s336 + $0x158] sm:$0xff]
        %v457 = vld [vmem:[%s336 + $0x160] sm:$0xff]
        %v458 = vld [vmem:[%s336 + $0x168] sm:$0xff]
        %v459 = vld [vmem:[%s336 + $0x170] sm:$0xff]
        %v460 = vld [vmem:[%s336 + $0x178] sm:$0xff]
        %v461 = vld [vmem:[%s336 + $0x180] sm:$0xff]
        %v462 = vld [vmem:[%s336 + $0x188] sm:$0xff]
        %v463 = vld [vmem:[%s336 + $0x190] sm:$0xff]
        %v464 = vld [vmem:[%s336 + $0x198] sm:$0xff]
        %v465 = vld [vmem:[%s336 + $0x1a0] sm:$0xff]
        %v466 = vld [vmem:[%s336 + $0x1a8] sm:$0xff]
        %v467 = vld [vmem:[%s336 + $0x1b0] sm:$0xff]
        %v468 = vld [vmem:[%s336 + $0x1b8] sm:$0xff]
        %v469 = vld [vmem:[%s336 + $0x1c0] sm:$0xff]
        %v470 = vld [vmem:[%s336 + $0x1c8] sm:$0xff]
        %v471 = vld [vmem:[%s336 + $0x1d0] sm:$0xff]
        %v472 = vld [vmem:[%s336 + $0x1d8] sm:$0xff]
        %v473 = vld [vmem:[%s336 + $0x1e0] sm:$0xff]
        %v474 = vld [vmem:[%s336 + $0x1e8] sm:$0xff]
        %v475 = vld [vmem:[%s336 + $0x1f0] sm:$0xff]
        %v476 = vld [vmem:[%s336 + $0x1f8] sm:$0xff]
        %v477 = vld [vmem:[%s336 + $0x200] sm:$0xff]
        %v478 = vld [vmem:[%s336 + $0x208] sm:$0xff]
        %v479 = vld [vmem:[%s336 + $0x210] sm:$0xff]
        %v480 = vld [vmem:[%s336 + $0x218] sm:$0xff]
        %v481 = vld [vmem:[%s336 + $0x220] sm:$0xff]
        %v482 = vld [vmem:[%s336 + $0x228] sm:$0xff]
        %v483 = vld [vmem:[%s336 + $0x230] sm:$0xff]
        %v484 = vld [vmem:[%s336 + $0x238] sm:$0xff]
        %v485 = vld [vmem:[%s336 + $0x240] sm:$0xff]
        %v486 = vld [vmem:[%s336 + $0x248] sm:$0xff]
        %v487 = vld [vmem:[%s336 + $0x250] sm:$0xff]
        %v488 = vld [vmem:[%s336 + $0x258] sm:$0xff]
        %v489 = vld [vmem:[%s336 + $0x260] sm:$0xff]
        %v490 = vld [vmem:[%s336 + $0x268] sm:$0xff]
        %v491 = vld [vmem:[%s336 + $0x270] sm:$0xff]
        %v492 = vld [vmem:[%s336 + $0x278] sm:$0xff]
        %v493 = vld [vmem:[%s336 + $0x280] sm:$0xff]
        %v494 = vld [vmem:[%s336 + $0x288] sm:$0xff]
        %v495 = vld [vmem:[%s336 + $0x290] sm:$0xff]
        %v496 = vld [vmem:[%s336 + $0x298] sm:$0xff]
        %v497 = vld [vmem:[%s336 + $0x2a0] sm:$0xff]
        %v498 = vld [vmem:[%s336 + $0x2a8] sm:$0xff]
        %v499 = vld [vmem:[%s336 + $0x2b0] sm:$0xff]
        %v500 = vld [vmem:[%s336 + $0x2b8] sm:$0xff]
        %v501 = vld [vmem:[%s336 + $0x2c0] sm:$0xff]
        %v502 = vld [vmem:[%s336 + $0x2c8] sm:$0xff]
        %v503 = vld [vmem:[%s336 + $0x2d0] sm:$0xff]
        %v504 = vld [vmem:[%s336 + $0x2d8] sm:$0xff]
        %v505 = vld [vmem:[%s336 + $0x2e0] sm:$0xff]
        %v506 = vld [vmem:[%s336 + $0x2e8] sm:$0xff]
        %v507 = vld [vmem:[%s336 + $0x2f0] sm:$0xff]
        %v508 = vld [vmem:[%s336 + $0x2f8] sm:$0xff]
        %v509 = vld [vmem:[%s336 + $0x300] sm:$0xff]
        %v510 = vld [vmem:[%s336 + $0x308] sm:$0xff]
        %v511 = vld [vmem:[%s336 + $0x310] sm:$0xff]
        %v512 = vld [vmem:[%s336 + $0x318] sm:$0xff]
        %v513 = vld [vmem:[%s336 + $0x320] sm:$0xff]
        %v514 = vld [vmem:[%s336 + $0x328] sm:$0xff]
        %v515 = vld [vmem:[%s336 + $0x330] sm:$0xff]
        %v516 = vld [vmem:[%s336 + $0x338] sm:$0xff]
        %v517 = vld [vmem:[%s336 + $0x340] sm:$0xff]
        %v518 = vld [vmem:[%s336 + $0x348] sm:$0xff]
        %v519 = vld [vmem:[%s336 + $0x350] sm:$0xff]
        %v520 = vld [vmem:[%s336 + $0x358] sm:$0xff]
        %v521 = vld [vmem:[%s336 + $0x360] sm:$0xff]
        %v522 = vld [vmem:[%s336 + $0x368] sm:$0xff]
        %v523 = vld [vmem:[%s336 + $0x370] sm:$0xff]
        %v524 = vld [vmem:[%s336 + $0x378] sm:$0xff]
        %v525 = vld [vmem:[%s336 + $0x380] sm:$0xff]
        %v526 = vld [vmem:[%s336 + $0x388] sm:$0xff]
        %v527 = vld [vmem:[%s336 + $0x390] sm:$0xff]
        %v528 = vld [vmem:[%s336 + $0x398] sm:$0xff]
        %v529 = vld [vmem:[%s336 + $0x3a0] sm:$0xff]
        %v530 = vld [vmem:[%s336 + $0x3a8] sm:$0xff]
        %v531 = vld [vmem:[%s336 + $0x3b0] sm:$0xff]
        %v532 = vld [vmem:[%s336 + $0x3b8] sm:$0xff]
        %v533 = vld [vmem:[%s336 + $0x3c0] sm:$0xff]
        %v534 = vld [vmem:[%s336 + $0x3c8] sm:$0xff]
        %v535 = vld [vmem:[%s336 + $0x3d0] sm:$0xff]
        %v536 = vld [vmem:[%s336 + $0x3d8] sm:$0xff]
        %v537 = vld [vmem:[%s336 + $0x3e0] sm:$0xff]
        %v538 = vld [vmem:[%s336 + $0x3e8] sm:$0xff]
        %v539 = vld [vmem:[%s336 + $0x3f0] sm:$0xff]
        %v540 = vld [vmem:[%s336 + $0x3f8] sm:$0xff]
        %v541 = vld [vmem:[%s336 + $0x400] sm:$0xff]
        %v542 = vld [vmem:[%s336 + $0x408] sm:$0xff]
        %v543 = vld [vmem:[%s336 + $0x410] sm:$0xff]
        %v544 = vld [vmem:[%s336 + $0x418] sm:$0xff]
        %v545 = vld [vmem:[%s336 + $0x420] sm:$0xff]
        %v546 = vld [vmem:[%s336 + $0x428] sm:$0xff]
        %v547 = vld [vmem:[%s336 + $0x430] sm:$0xff]
        %v548 = vld [vmem:[%s336 + $0x438] sm:$0xff]
        %v549 = vld [vmem:[%s336 + $0x440] sm:$0xff]
        %v550 = vld [vmem:[%s336 + $0x448] sm:$0xff]
        %v551 = vld [vmem:[%s336 + $0x450] sm:$0xff]
        %v552 = vld [vmem:[%s336 + $0x458] sm:$0xff]
        %v553 = vld [vmem:[%s336 + $0x460] sm:$0xff]
        %v554 = vld [vmem:[%s336 + $0x468] sm:$0xff]
        %v555 = vld [vmem:[%s336 + $0x470] sm:$0xff]
        %v556 = vld [vmem:[%s336 + $0x478] sm:$0xff]
        %v557 = vld [vmem:[%s336 + $0x480] sm:$0xff]
        %v558 = vld [vmem:[%s336 + $0x488] sm:$0xff]
        %v559 = vld [vmem:[%s336 + $0x490] sm:$0xff]
        %v560 = vld [vmem:[%s336 + $0x498] sm:$0xff]
        %v561 = vld [vmem:[%s336 + $0x4a0] sm:$0xff]
        %v562 = vld [vmem:[%s336 + $0x4a8] sm:$0xff]
        %v563 = vld [vmem:[%s336 + $0x4b0] sm:$0xff]
        %v564 = vld [vmem:[%s336 + $0x4b8] sm:$0xff]
        %v565 = vld [vmem:[%s336 + $0x4c0] sm:$0xff]
        %v566 = vld [vmem:[%s336 + $0x4c8] sm:$0xff]
        %v567 = vld [vmem:[%s336 + $0x4d0] sm:$0xff]
        %v568 = vld [vmem:[%s336 + $0x4d8] sm:$0xff]
        %v569 = vld [vmem:[%s336 + $0x4e0] sm:$0xff]
        %v570 = vld [vmem:[%s336 + $0x4e8] sm:$0xff]
        %v571 = vld [vmem:[%s336 + $0x4f0] sm:$0xff]
        %v572 = vld [vmem:[%s336 + $0x4f8] sm:$0xff]
        %v573 = vld [vmem:[%s336 + $0x500] sm:$0xff]
        %v574 = vld [vmem:[%s336 + $0x508] sm:$0xff]
        %v575 = vld [vmem:[%s336 + $0x510] sm:$0xff]
        %v576 = vld [vmem:[%s336 + $0x518] sm:$0xff]
        %v577 = vld [vmem:[%s336 + $0x520] sm:$0xff]
        %v578 = vld [vmem:[%s336 + $0x528] sm:$0xff]
        %v579 = vld [vmem:[%s336 + $0x530] sm:$0xff]
        %v580 = vld [vmem:[%s336 + $0x538] sm:$0xff]
        %v581 = vld [vmem:[%s336 + $0x540] sm:$0xff]
        %v582 = vld [vmem:[%s336 + $0x548] sm:$0xff]
        %v583 = vld [vmem:[%s336 + $0x550] sm:$0xff]
        %v584 = vld [vmem:[%s336 + $0x558] sm:$0xff]
        %v585 = vld [vmem:[%s336 + $0x560] sm:$0xff]
        %v586 = vld [vmem:[%s336 + $0x568] sm:$0xff]
        %v587 = vld [vmem:[%s336 + $0x570] sm:$0xff]
        %v588 = vld [vmem:[%s336 + $0x578] sm:$0xff]
        %v589 = vld [vmem:[%s336 + $0x580] sm:$0xff]
        %v590 = vld [vmem:[%s336 + $0x588] sm:$0xff]
        %v591 = vld [vmem:[%s336 + $0x590] sm:$0xff]
        %v592 = vld [vmem:[%s336 + $0x598] sm:$0xff]
        %v593 = vld [vmem:[%s336 + $0x5a0] sm:$0xff]
        %v594 = vld [vmem:[%s336 + $0x5a8] sm:$0xff]
        %v595 = vld [vmem:[%s336 + $0x5b0] sm:$0xff]
        %v596 = vld [vmem:[%s336 + $0x5b8] sm:$0xff]
        %v597 = vld [vmem:[%s336 + $0x5c0] sm:$0xff]
        %v598 = vld [vmem:[%s336 + $0x5c8] sm:$0xff]
        %v599 = vld [vmem:[%s336 + $0x5d0] sm:$0xff]
        %v600 = vld [vmem:[%s336 + $0x5d8] sm:$0xff]
        %v601 = vld [vmem:[%s336 + $0x5e0] sm:$0xff]
        %v602 = vld [vmem:[%s336 + $0x5e8] sm:$0xff]
        %v603 = vld [vmem:[%s336 + $0x5f0] sm:$0xff]
        %v604 = vld [vmem:[%s336 + $0x5f8] sm:$0xff]
        %v605 = vld [vmem:[%s336 + $0x600] sm:$0xff]
        %v606 = vld [vmem:[%s336 + $0x608] sm:$0xff]
        %v607 = vld [vmem:[%s336 + $0x610] sm:$0xff]
        %v608 = vld [vmem:[%s336 + $0x618] sm:$0xff]
        %v609 = vld [vmem:[%s336 + $0x620] sm:$0xff]
        %v610 = vld [vmem:[%s336 + $0x628] sm:$0xff]
        %v611 = vld [vmem:[%s336 + $0x630] sm:$0xff]
        %v612 = vld [vmem:[%s336 + $0x638] sm:$0xff]
        %v613 = vld [vmem:[%s336 + $0x640] sm:$0xff]
        %v614 = vld [vmem:[%s336 + $0x648] sm:$0xff]
        %v615 = vld [vmem:[%s336 + $0x650] sm:$0xff]
        %v616 = vld [vmem:[%s336 + $0x658] sm:$0xff]
        %v617 = vld [vmem:[%s336 + $0x660] sm:$0xff]
        %v618 = vld [vmem:[%s336 + $0x668] sm:$0xff]
        %v619 = vld [vmem:[%s336 + $0x670] sm:$0xff]
        %v620 = vld [vmem:[%s336 + $0x678] sm:$0xff]
        %v621 = vld [vmem:[%s336 + $0x680] sm:$0xff]
        %v622 = vld [vmem:[%s336 + $0x688] sm:$0xff]
        %v623 = vld [vmem:[%s336 + $0x690] sm:$0xff]
        %v624 = vld [vmem:[%s336 + $0x698] sm:$0xff]
        %v625 = vld [vmem:[%s336 + $0x6a0] sm:$0xff]
        %v626 = vld [vmem:[%s336 + $0x6a8] sm:$0xff]
        %v627 = vld [vmem:[%s336 + $0x6b0] sm:$0xff]
        %v628 = vld [vmem:[%s336 + $0x6b8] sm:$0xff]
        %v629 = vld [vmem:[%s336 + $0x6c0] sm:$0xff]
        %v630 = vld [vmem:[%s336 + $0x6c8] sm:$0xff]
        %v631 = vld [vmem:[%s336 + $0x6d0] sm:$0xff]
        %v632 = vld [vmem:[%s336 + $0x6d8] sm:$0xff]
        %v633 = vld [vmem:[%s336 + $0x6e0] sm:$0xff]
        %v634 = vld [vmem:[%s336 + $0x6e8] sm:$0xff]
        %v635 = vld [vmem:[%s336 + $0x6f0] sm:$0xff]
        %v636 = vld [vmem:[%s336 + $0x6f8] sm:$0xff]
        %v637 = vld [vmem:[%s336 + $0x700] sm:$0xff]
        %v638 = vld [vmem:[%s336 + $0x708] sm:$0xff]
        %v639 = vld [vmem:[%s336 + $0x710] sm:$0xff]
        %v640 = vld [vmem:[%s336 + $0x718] sm:$0xff]
        %v641 = vld [vmem:[%s336 + $0x720] sm:$0xff]
        %v642 = vld [vmem:[%s336 + $0x728] sm:$0xff]
        %v643 = vld [vmem:[%s336 + $0x730] sm:$0xff]
        %v644 = vld [vmem:[%s336 + $0x738] sm:$0xff]
        %v645 = vld [vmem:[%s336 + $0x740] sm:$0xff]
        %v646 = vld [vmem:[%s336 + $0x748] sm:$0xff]
        %v647 = vld [vmem:[%s336 + $0x750] sm:$0xff]
        %v648 = vld [vmem:[%s336 + $0x758] sm:$0xff]
        %v649 = vld [vmem:[%s336 + $0x760] sm:$0xff]
        %v650 = vld [vmem:[%s336 + $0x768] sm:$0xff]
        %v651 = vld [vmem:[%s336 + $0x770] sm:$0xff]
        %v652 = vld [vmem:[%s336 + $0x778] sm:$0xff]
        %v653 = vld [vmem:[%s336 + $0x780] sm:$0xff]
        %v654 = vld [vmem:[%s336 + $0x788] sm:$0xff]
        %v655 = vld [vmem:[%s336 + $0x790] sm:$0xff]
        %v656 = vld [vmem:[%s336 + $0x798] sm:$0xff]
        %v657 = vld [vmem:[%s336 + $0x7a0] sm:$0xff]
        %v658 = vld [vmem:[%s336 + $0x7a8] sm:$0xff]
        %v659 = vld [vmem:[%s336 + $0x7b0] sm:$0xff]
        %v660 = vld [vmem:[%s336 + $0x7b8] sm:$0xff]
        %v661 = vld [vmem:[%s336 + $0x7c0] sm:$0xff]
        %v662 = vld [vmem:[%s336 + $0x7c8] sm:$0xff]
        %v663 = vld [vmem:[%s336 + $0x7d0] sm:$0xff]
        %v664 = vld [vmem:[%s336 + $0x7d8] sm:$0xff]
        %v665 = vld [vmem:[%s336 + $0x7e0] sm:$0xff]
        %v666 = vld [vmem:[%s336 + $0x7e8] sm:$0xff]
        %v667 = vld [vmem:[%s336 + $0x7f0] sm:$0xff]
        %v668 = vld [vmem:[%s336 + $0x7f8] sm:$0xff]
        %v671 = vunpack.c.l.b16 %v411
        %v672 = vunpack.c.h.b16 %v411
        %v673 = vunpack.c.l.b16 %v412
        %v674 = vunpack.c.h.b16 %v412
        %v675 = vpack.c.b16 %v671, %v671
        %v676 = vpack.c.b16 %v672, %v672
        %v677 = vpack.c.b16 %v673, %v673
        %v678 = vpack.c.b16 %v674, %v674
        %v939 = vunpack.c.l.b16 %v413
        %v940 = vunpack.c.h.b16 %v413
        %v941 = vunpack.c.l.b16 %v414
        %v942 = vunpack.c.h.b16 %v414
        %v943 = vunpack.c.l.b16 %v415
        %v944 = vunpack.c.h.b16 %v415
        %v945 = vunpack.c.l.b16 %v416
        %v946 = vunpack.c.h.b16 %v416
        %v947 = vunpack.c.l.b16 %v417
        %v948 = vunpack.c.h.b16 %v417
        %v949 = vunpack.c.l.b16 %v418
        %v950 = vunpack.c.h.b16 %v418
        %v951 = vunpack.c.l.b16 %v419
        %v952 = vunpack.c.h.b16 %v419
        %v953 = vunpack.c.l.b16 %v420
        %v954 = vunpack.c.h.b16 %v420
        %v955 = vunpack.c.l.b16 %v421
        %v956 = vunpack.c.h.b16 %v421
        %v957 = vunpack.c.l.b16 %v422
        %v958 = vunpack.c.h.b16 %v422
        %v959 = vunpack.c.l.b16 %v423
        %v960 = vunpack.c.h.b16 %v423
        %v961 = vunpack.c.l.b16 %v424
        %v962 = vunpack.c.h.b16 %v424
        %v963 = vunpack.c.l.b16 %v425
        %v964 = vunpack.c.h.b16 %v425
        %v965 = vunpack.c.l.b16 %v426
        %v966 = vunpack.c.h.b16 %v426
        %v967 = vunpack.c.l.b16 %v427
        %v968 = vunpack.c.h.b16 %v427
        %v969 = vunpack.c.l.b16 %v428
        %v970 = vunpack.c.h.b16 %v428
        %v971 = vunpack.c.l.b16 %v429
        %v972 = vunpack.c.h.b16 %v429
        %v973 = vunpack.c.l.b16 %v430
        %v974 = vunpack.c.h.b16 %v430
        %v975 = vunpack.c.l.b16 %v431
        %v976 = vunpack.c.h.b16 %v431
        %v977 = vunpack.c.l.b16 %v432
        %v978 = vunpack.c.h.b16 %v432
        %v979 = vunpack.c.l.b16 %v433
        %v980 = vunpack.c.h.b16 %v433
        %v981 = vunpack.c.l.b16 %v434
        %v982 = vunpack.c.h.b16 %v434
        %v983 = vunpack.c.l.b16 %v435
        %v984 = vunpack.c.h.b16 %v435
        %v985 = vunpack.c.l.b16 %v436
        %v986 = vunpack.c.h.b16 %v436
        %v987 = vunpack.c.l.b16 %v437
        %v988 = vunpack.c.h.b16 %v437
        %v989 = vunpack.c.l.b16 %v438
        %v990 = vunpack.c.h.b16 %v438
        %v991 = vunpack.c.l.b16 %v439
        %v992 = vunpack.c.h.b16 %v439
        %v993 = vunpack.c.l.b16 %v440
        %v994 = vunpack.c.h.b16 %v440
        %v995 = vunpack.c.l.b16 %v441
        %v996 = vunpack.c.h.b16 %v441
        %v997 = vunpack.c.l.b16 %v442
        %v998 = vunpack.c.h.b16 %v442
        %v999 = vunpack.c.l.b16 %v443
        %v1000 = vunpack.c.h.b16 %v443
        %v1001 = vunpack.c.l.b16 %v444
        %v1002 = vunpack.c.h.b16 %v444
        %v1003 = vunpack.c.l.b16 %v445
        %v1004 = vunpack.c.h.b16 %v445
        %v1005 = vunpack.c.l.b16 %v446
        %v1006 = vunpack.c.h.b16 %v446
        %v1007 = vunpack.c.l.b16 %v447
        %v1008 = vunpack.c.h.b16 %v447
        %v1009 = vunpack.c.l.b16 %v448
        %v1010 = vunpack.c.h.b16 %v448
        %v1011 = vunpack.c.l.b16 %v449
        %v1012 = vunpack.c.h.b16 %v449
        %v1013 = vunpack.c.l.b16 %v450
        %v1014 = vunpack.c.h.b16 %v450
        %v1015 = vunpack.c.l.b16 %v451
        %v1016 = vunpack.c.h.b16 %v451
        %v1017 = vunpack.c.l.b16 %v452
        %v1018 = vunpack.c.h.b16 %v452
        %v1019 = vunpack.c.l.b16 %v453
        %v1020 = vunpack.c.h.b16 %v453
        %v1021 = vunpack.c.l.b16 %v454
        %v1022 = vunpack.c.h.b16 %v454
        %v1023 = vunpack.c.l.b16 %v455
        %v1024 = vunpack.c.h.b16 %v455
        %v1025 = vunpack.c.l.b16 %v456
        %v1026 = vunpack.c.h.b16 %v456
        %v1027 = vunpack.c.l.b16 %v457
        %v1028 = vunpack.c.h.b16 %v457
        %v1029 = vunpack.c.l.b16 %v458
        %v1030 = vunpack.c.h.b16 %v458
        %v1031 = vunpack.c.l.b16 %v459
        %v1032 = vunpack.c.h.b16 %v459
        %v1033 = vunpack.c.l.b16 %v460
        %v1034 = vunpack.c.h.b16 %v460
        %v1035 = vunpack.c.l.b16 %v461
        %v1036 = vunpack.c.h.b16 %v461
        %v1037 = vunpack.c.l.b16 %v462
        %v1038 = vunpack.c.h.b16 %v462
        %v1039 = vunpack.c.l.b16 %v463
        %v1040 = vunpack.c.h.b16 %v463
        %v1041 = vunpack.c.l.b16 %v464
        %v1042 = vunpack.c.h.b16 %v464
        %v1043 = vunpack.c.l.b16 %v465
        %v1044 = vunpack.c.h.b16 %v465
        %v1045 = vunpack.c.l.b16 %v466
        %v1046 = vunpack.c.h.b16 %v466
        %v1047 = vunpack.c.l.b16 %v467
        %v1048 = vunpack.c.h.b16 %v467
        %v1049 = vunpack.c.l.b16 %v468
        %v1050 = vunpack.c.h.b16 %v468
        %v1051 = vunpack.c.l.b16 %v469
        %v1052 = vunpack.c.h.b16 %v469
        %v1053 = vunpack.c.l.b16 %v470
        %v1054 = vunpack.c.h.b16 %v470
        %v1055 = vunpack.c.l.b16 %v471
        %v1056 = vunpack.c.h.b16 %v471
        %v1057 = vunpack.c.l.b16 %v472
        %v1058 = vunpack.c.h.b16 %v472
        %v1059 = vunpack.c.l.b16 %v473
        %v1060 = vunpack.c.h.b16 %v473
        %v1061 = vunpack.c.l.b16 %v474
        %v1062 = vunpack.c.h.b16 %v474
        %v1063 = vunpack.c.l.b16 %v475
        %v1064 = vunpack.c.h.b16 %v475
        %v1065 = vunpack.c.l.b16 %v476
        %v1066 = vunpack.c.h.b16 %v476
        %v1067 = vunpack.c.l.b16 %v477
        %v1068 = vunpack.c.h.b16 %v477
        %v1069 = vunpack.c.l.b16 %v478
        %v1070 = vunpack.c.h.b16 %v478
        %v1071 = vunpack.c.l.b16 %v479
        %v1072 = vunpack.c.h.b16 %v479
        %v1073 = vunpack.c.l.b16 %v480
        %v1074 = vunpack.c.h.b16 %v480
        %v1075 = vunpack.c.l.b16 %v481
        %v1076 = vunpack.c.h.b16 %v481
        %v1077 = vunpack.c.l.b16 %v482
        %v1078 = vunpack.c.h.b16 %v482
        %v1079 = vunpack.c.l.b16 %v483
        %v1080 = vunpack.c.h.b16 %v483
        %v1081 = vunpack.c.l.b16 %v484
        %v1082 = vunpack.c.h.b16 %v484
        %v1083 = vunpack.c.l.b16 %v485
        %v1084 = vunpack.c.h.b16 %v485
        %v1085 = vunpack.c.l.b16 %v486
        %v1086 = vunpack.c.h.b16 %v486
        %v1087 = vunpack.c.l.b16 %v487
        %v1088 = vunpack.c.h.b16 %v487
        %v1089 = vunpack.c.l.b16 %v488
        %v1090 = vunpack.c.h.b16 %v488
        %v1091 = vunpack.c.l.b16 %v489
        %v1092 = vunpack.c.h.b16 %v489
        %v1093 = vunpack.c.l.b16 %v490
        %v1094 = vunpack.c.h.b16 %v490
        %v1095 = vunpack.c.l.b16 %v491
        %v1096 = vunpack.c.h.b16 %v491
        %v1097 = vunpack.c.l.b16 %v492
        %v1098 = vunpack.c.h.b16 %v492
        %v1099 = vunpack.c.l.b16 %v493
        %v1100 = vunpack.c.h.b16 %v493
        %v1101 = vunpack.c.l.b16 %v494
        %v1102 = vunpack.c.h.b16 %v494
        %v1103 = vunpack.c.l.b16 %v495
        %v1104 = vunpack.c.h.b16 %v495
        %v1105 = vunpack.c.l.b16 %v496
        %v1106 = vunpack.c.h.b16 %v496
        %v1107 = vunpack.c.l.b16 %v497
        %v1108 = vunpack.c.h.b16 %v497
        %v1109 = vunpack.c.l.b16 %v498
        %v1110 = vunpack.c.h.b16 %v498
        %v1111 = vunpack.c.l.b16 %v499
        %v1112 = vunpack.c.h.b16 %v499
        %v1113 = vunpack.c.l.b16 %v500
        %v1114 = vunpack.c.h.b16 %v500
        %v1115 = vunpack.c.l.b16 %v501
        %v1116 = vunpack.c.h.b16 %v501
        %v1117 = vunpack.c.l.b16 %v502
        %v1118 = vunpack.c.h.b16 %v502
        %v1119 = vunpack.c.l.b16 %v503
        %v1120 = vunpack.c.h.b16 %v503
        %v1121 = vunpack.c.l.b16 %v504
        %v1122 = vunpack.c.h.b16 %v504
        %v1123 = vunpack.c.l.b16 %v505
        %v1124 = vunpack.c.h.b16 %v505
        %v1125 = vunpack.c.l.b16 %v506
        %v1126 = vunpack.c.h.b16 %v506
        %v1127 = vunpack.c.l.b16 %v507
        %v1128 = vunpack.c.h.b16 %v507
        %v1129 = vunpack.c.l.b16 %v508
        %v1130 = vunpack.c.h.b16 %v508
        %v1131 = vunpack.c.l.b16 %v509
        %v1132 = vunpack.c.h.b16 %v509
        %v1133 = vunpack.c.l.b16 %v510
        %v1134 = vunpack.c.h.b16 %v510
        %v1135 = vunpack.c.l.b16 %v511
        %v1136 = vunpack.c.h.b16 %v511
        %v1137 = vunpack.c.l.b16 %v512
        %v1138 = vunpack.c.h.b16 %v512
        %v1139 = vunpack.c.l.b16 %v513
        %v1140 = vunpack.c.h.b16 %v513
        %v1141 = vunpack.c.l.b16 %v514
        %v1142 = vunpack.c.h.b16 %v514
        %v1143 = vunpack.c.l.b16 %v515
        %v1144 = vunpack.c.h.b16 %v515
        %v1145 = vunpack.c.l.b16 %v516
        %v1146 = vunpack.c.h.b16 %v516
        %v1147 = vunpack.c.l.b16 %v517
        %v1148 = vunpack.c.h.b16 %v517
        %v1149 = vunpack.c.l.b16 %v518
        %v1150 = vunpack.c.h.b16 %v518
        %v1151 = vunpack.c.l.b16 %v519
        %v1152 = vunpack.c.h.b16 %v519
        %v1153 = vunpack.c.l.b16 %v520
        %v1154 = vunpack.c.h.b16 %v520
        %v1155 = vunpack.c.l.b16 %v521
        %v1156 = vunpack.c.h.b16 %v521
        %v1157 = vunpack.c.l.b16 %v522
        %v1158 = vunpack.c.h.b16 %v522
        %v1159 = vunpack.c.l.b16 %v523
        %v1160 = vunpack.c.h.b16 %v523
        %v1161 = vunpack.c.l.b16 %v524
        %v1162 = vunpack.c.h.b16 %v524
        %v1163 = vunpack.c.l.b16 %v525
        %v1164 = vunpack.c.h.b16 %v525
        %v1165 = vunpack.c.l.b16 %v526
        %v1166 = vunpack.c.h.b16 %v526
        %v1167 = vunpack.c.l.b16 %v527
        %v1168 = vunpack.c.h.b16 %v527
        %v1169 = vunpack.c.l.b16 %v528
        %v1170 = vunpack.c.h.b16 %v528
        %v1171 = vunpack.c.l.b16 %v529
        %v1172 = vunpack.c.h.b16 %v529
        %v1173 = vunpack.c.l.b16 %v530
        %v1174 = vunpack.c.h.b16 %v530
        %v1175 = vunpack.c.l.b16 %v531
        %v1176 = vunpack.c.h.b16 %v531
        %v1177 = vunpack.c.l.b16 %v532
        %v1178 = vunpack.c.h.b16 %v532
        %v1179 = vunpack.c.l.b16 %v533
        %v1180 = vunpack.c.h.b16 %v533
        %v1181 = vunpack.c.l.b16 %v534
        %v1182 = vunpack.c.h.b16 %v534
        %v1183 = vunpack.c.l.b16 %v535
        %v1184 = vunpack.c.h.b16 %v535
        %v1185 = vunpack.c.l.b16 %v536
        %v1186 = vunpack.c.h.b16 %v536
        %v1187 = vunpack.c.l.b16 %v537
        %v1188 = vunpack.c.h.b16 %v537
        %v1189 = vunpack.c.l.b16 %v538
        %v1190 = vunpack.c.h.b16 %v538
        %v1191 = vunpack.c.l.b16 %v539
        %v1192 = vunpack.c.h.b16 %v539
        %v1193 = vunpack.c.l.b16 %v540
        %v1194 = vunpack.c.h.b16 %v540
        %v1195 = vunpack.c.l.b16 %v541
        %v1196 = vunpack.c.h.b16 %v541
        %v1197 = vunpack.c.l.b16 %v542
        %v1198 = vunpack.c.h.b16 %v542
        %v1199 = vunpack.c.l.b16 %v543
        %v1200 = vunpack.c.h.b16 %v543
        %v1201 = vunpack.c.l.b16 %v544
        %v1202 = vunpack.c.h.b16 %v544
        %v1203 = vunpack.c.l.b16 %v545
        %v1204 = vunpack.c.h.b16 %v545
        %v1205 = vunpack.c.l.b16 %v546
        %v1206 = vunpack.c.h.b16 %v546
        %v1207 = vunpack.c.l.b16 %v547
        %v1208 = vunpack.c.h.b16 %v547
        %v1209 = vunpack.c.l.b16 %v548
        %v1210 = vunpack.c.h.b16 %v548
        %v1211 = vunpack.c.l.b16 %v549
        %v1212 = vunpack.c.h.b16 %v549
        %v1213 = vunpack.c.l.b16 %v550
        %v1214 = vunpack.c.h.b16 %v550
        %v1215 = vunpack.c.l.b16 %v551
        %v1216 = vunpack.c.h.b16 %v551
        %v1217 = vunpack.c.l.b16 %v552
        %v1218 = vunpack.c.h.b16 %v552
        %v1219 = vunpack.c.l.b16 %v553
        %v1220 = vunpack.c.h.b16 %v553
        %v1221 = vunpack.c.l.b16 %v554
        %v1222 = vunpack.c.h.b16 %v554
        %v1223 = vunpack.c.l.b16 %v555
        %v1224 = vunpack.c.h.b16 %v555
        %v1225 = vunpack.c.l.b16 %v556
        %v1226 = vunpack.c.h.b16 %v556
        %v1227 = vunpack.c.l.b16 %v557
        %v1228 = vunpack.c.h.b16 %v557
        %v1229 = vunpack.c.l.b16 %v558
        %v1230 = vunpack.c.h.b16 %v558
        %v1231 = vunpack.c.l.b16 %v559
        %v1232 = vunpack.c.h.b16 %v559
        %v1233 = vunpack.c.l.b16 %v560
        %v1234 = vunpack.c.h.b16 %v560
        %v1235 = vunpack.c.l.b16 %v561
        %v1236 = vunpack.c.h.b16 %v561
        %v1237 = vunpack.c.l.b16 %v562
        %v1238 = vunpack.c.h.b16 %v562
        %v1239 = vunpack.c.l.b16 %v563
        %v1240 = vunpack.c.h.b16 %v563
        %v1241 = vunpack.c.l.b16 %v564
        %v1242 = vunpack.c.h.b16 %v564
        %v1243 = vunpack.c.l.b16 %v565
        %v1244 = vunpack.c.h.b16 %v565
        %v1245 = vunpack.c.l.b16 %v566
        %v1246 = vunpack.c.h.b16 %v566
        %v1247 = vunpack.c.l.b16 %v567
        %v1248 = vunpack.c.h.b16 %v567
        %v1249 = vunpack.c.l.b16 %v568
        %v1250 = vunpack.c.h.b16 %v568
        %v1251 = vunpack.c.l.b16 %v569
        %v1252 = vunpack.c.h.b16 %v569
        %v1253 = vunpack.c.l.b16 %v570
        %v1254 = vunpack.c.h.b16 %v570
        %v1255 = vunpack.c.l.b16 %v571
        %v1256 = vunpack.c.h.b16 %v571
        %v1257 = vunpack.c.l.b16 %v572
        %v1258 = vunpack.c.h.b16 %v572
        %v1259 = vunpack.c.l.b16 %v573
        %v1260 = vunpack.c.h.b16 %v573
        %v1261 = vunpack.c.l.b16 %v574
        %v1262 = vunpack.c.h.b16 %v574
        %v1263 = vunpack.c.l.b16 %v575
        %v1264 = vunpack.c.h.b16 %v575
        %v1265 = vunpack.c.l.b16 %v576
        %v1266 = vunpack.c.h.b16 %v576
        %v1267 = vunpack.c.l.b16 %v577
        %v1268 = vunpack.c.h.b16 %v577
        %v1269 = vunpack.c.l.b16 %v578
        %v1270 = vunpack.c.h.b16 %v578
        %v1271 = vunpack.c.l.b16 %v579
        %v1272 = vunpack.c.h.b16 %v579
        %v1273 = vunpack.c.l.b16 %v580
        %v1274 = vunpack.c.h.b16 %v580
        %v1275 = vunpack.c.l.b16 %v581
        %v1276 = vunpack.c.h.b16 %v581
        %v1277 = vunpack.c.l.b16 %v582
        %v1278 = vunpack.c.h.b16 %v582
        %v1279 = vunpack.c.l.b16 %v583
        %v1280 = vunpack.c.h.b16 %v583
        %v1281 = vunpack.c.l.b16 %v584
        %v1282 = vunpack.c.h.b16 %v584
        %v1283 = vunpack.c.l.b16 %v585
        %v1284 = vunpack.c.h.b16 %v585
        %v1285 = vunpack.c.l.b16 %v586
        %v1286 = vunpack.c.h.b16 %v586
        %v1287 = vunpack.c.l.b16 %v587
        %v1288 = vunpack.c.h.b16 %v587
        %v1289 = vunpack.c.l.b16 %v588
        %v1290 = vunpack.c.h.b16 %v588
        %v1291 = vunpack.c.l.b16 %v589
        %v1292 = vunpack.c.h.b16 %v589
        %v1293 = vunpack.c.l.b16 %v590
        %v1294 = vunpack.c.h.b16 %v590
        %v1295 = vunpack.c.l.b16 %v591
        %v1296 = vunpack.c.h.b16 %v591
        %v1297 = vunpack.c.l.b16 %v592
        %v1298 = vunpack.c.h.b16 %v592
        %v1299 = vunpack.c.l.b16 %v593
        %v1300 = vunpack.c.h.b16 %v593
        %v1301 = vunpack.c.l.b16 %v594
        %v1302 = vunpack.c.h.b16 %v594
        %v1303 = vunpack.c.l.b16 %v595
        %v1304 = vunpack.c.h.b16 %v595
        %v1305 = vunpack.c.l.b16 %v596
        %v1306 = vunpack.c.h.b16 %v596
        %v1307 = vunpack.c.l.b16 %v597
        %v1308 = vunpack.c.h.b16 %v597
        %v1309 = vunpack.c.l.b16 %v598
        %v1310 = vunpack.c.h.b16 %v598
        %v1311 = vunpack.c.l.b16 %v599
        %v1312 = vunpack.c.h.b16 %v599
        %v1313 = vunpack.c.l.b16 %v600
        %v1314 = vunpack.c.h.b16 %v600
        %v1315 = vunpack.c.l.b16 %v601
        %v1316 = vunpack.c.h.b16 %v601
        %v1317 = vunpack.c.l.b16 %v602
        %v1318 = vunpack.c.h.b16 %v602
        %v1319 = vunpack.c.l.b16 %v603
        %v1320 = vunpack.c.h.b16 %v603
        %v1321 = vunpack.c.l.b16 %v604
        %v1322 = vunpack.c.h.b16 %v604
        %v1323 = vunpack.c.l.b16 %v605
        %v1324 = vunpack.c.h.b16 %v605
        %v1325 = vunpack.c.l.b16 %v606
        %v1326 = vunpack.c.h.b16 %v606
        %v1327 = vunpack.c.l.b16 %v607
        %v1328 = vunpack.c.h.b16 %v607
        %v1329 = vunpack.c.l.b16 %v608
        %v1330 = vunpack.c.h.b16 %v608
        %v1331 = vunpack.c.l.b16 %v609
        %v1332 = vunpack.c.h.b16 %v609
        %v1333 = vunpack.c.l.b16 %v610
        %v1334 = vunpack.c.h.b16 %v610
        %v1335 = vunpack.c.l.b16 %v611
        %v1336 = vunpack.c.h.b16 %v611
        %v1337 = vunpack.c.l.b16 %v612
        %v1338 = vunpack.c.h.b16 %v612
        %v1339 = vunpack.c.l.b16 %v613
        %v1340 = vunpack.c.h.b16 %v613
        %v1341 = vunpack.c.l.b16 %v614
        %v1342 = vunpack.c.h.b16 %v614
        %v1343 = vunpack.c.l.b16 %v615
        %v1344 = vunpack.c.h.b16 %v615
        %v1345 = vunpack.c.l.b16 %v616
        %v1346 = vunpack.c.h.b16 %v616
        %v1347 = vunpack.c.l.b16 %v617
        %v1348 = vunpack.c.h.b16 %v617
        %v1349 = vunpack.c.l.b16 %v618
        %v1350 = vunpack.c.h.b16 %v618
        %v1351 = vunpack.c.l.b16 %v619
        %v1352 = vunpack.c.h.b16 %v619
        %v1353 = vunpack.c.l.b16 %v620
        %v1354 = vunpack.c.h.b16 %v620
        %v1355 = vunpack.c.l.b16 %v621
        %v1356 = vunpack.c.h.b16 %v621
        %v1357 = vunpack.c.l.b16 %v622
        %v1358 = vunpack.c.h.b16 %v622
        %v1359 = vunpack.c.l.b16 %v623
        %v1360 = vunpack.c.h.b16 %v623
        %v1361 = vunpack.c.l.b16 %v624
        %v1362 = vunpack.c.h.b16 %v624
        %v1363 = vunpack.c.l.b16 %v625
        %v1364 = vunpack.c.h.b16 %v625
        %v1365 = vunpack.c.l.b16 %v626
        %v1366 = vunpack.c.h.b16 %v626
        %v1367 = vunpack.c.l.b16 %v627
        %v1368 = vunpack.c.h.b16 %v627
        %v1369 = vunpack.c.l.b16 %v628
        %v1370 = vunpack.c.h.b16 %v628
        %v1371 = vunpack.c.l.b16 %v629
        %v1372 = vunpack.c.h.b16 %v629
        %v1373 = vunpack.c.l.b16 %v630
        %v1374 = vunpack.c.h.b16 %v630
        %v1375 = vunpack.c.l.b16 %v631
        %v1376 = vunpack.c.h.b16 %v631
        %v1377 = vunpack.c.l.b16 %v632
        %v1378 = vunpack.c.h.b16 %v632
        %v1379 = vunpack.c.l.b16 %v633
        %v1380 = vunpack.c.h.b16 %v633
        %v1381 = vunpack.c.l.b16 %v634
        %v1382 = vunpack.c.h.b16 %v634
        %v1383 = vunpack.c.l.b16 %v635
        %v1384 = vunpack.c.h.b16 %v635
        %v1385 = vunpack.c.l.b16 %v636
        %v1386 = vunpack.c.h.b16 %v636
        %v1387 = vunpack.c.l.b16 %v637
        %v1388 = vunpack.c.h.b16 %v637
        %v1389 = vunpack.c.l.b16 %v638
        %v1390 = vunpack.c.h.b16 %v638
        %v1391 = vunpack.c.l.b16 %v639
        %v1392 = vunpack.c.h.b16 %v639
        %v1393 = vunpack.c.l.b16 %v640
        %v1394 = vunpack.c.h.b16 %v640
        %v1395 = vunpack.c.l.b16 %v641
        %v1396 = vunpack.c.h.b16 %v641
        %v1397 = vunpack.c.l.b16 %v642
        %v1398 = vunpack.c.h.b16 %v642
        %v1399 = vunpack.c.l.b16 %v643
        %v1400 = vunpack.c.h.b16 %v643
        %v1401 = vunpack.c.l.b16 %v644
        %v1402 = vunpack.c.h.b16 %v644
        %v1403 = vunpack.c.l.b16 %v645
        %v1404 = vunpack.c.h.b16 %v645
        %v1405 = vunpack.c.l.b16 %v646
        %v1406 = vunpack.c.h.b16 %v646
        %v1407 = vunpack.c.l.b16 %v647
        %v1408 = vunpack.c.h.b16 %v647
        %v1409 = vunpack.c.l.b16 %v648
        %v1410 = vunpack.c.h.b16 %v648
        %v1411 = vunpack.c.l.b16 %v649
        %v1412 = vunpack.c.h.b16 %v649
        %v1413 = vunpack.c.l.b16 %v650
        %v1414 = vunpack.c.h.b16 %v650
        %v1415 = vunpack.c.l.b16 %v651
        %v1416 = vunpack.c.h.b16 %v651
        %v1417 = vunpack.c.l.b16 %v652
        %v1418 = vunpack.c.h.b16 %v652
        %v1419 = vunpack.c.l.b16 %v653
        %v1420 = vunpack.c.h.b16 %v653
        %v1421 = vunpack.c.l.b16 %v654
        %v1422 = vunpack.c.h.b16 %v654
        %v1423 = vunpack.c.l.b16 %v655
        %v1424 = vunpack.c.h.b16 %v655
        %v1425 = vunpack.c.l.b16 %v656
        %v1426 = vunpack.c.h.b16 %v656
        %v1427 = vunpack.c.l.b16 %v657
        %v1428 = vunpack.c.h.b16 %v657
        %v1429 = vunpack.c.l.b16 %v658
        %v1430 = vunpack.c.h.b16 %v658
        %v1431 = vunpack.c.l.b16 %v659
        %v1432 = vunpack.c.h.b16 %v659
        %v1433 = vunpack.c.l.b16 %v660
        %v1434 = vunpack.c.h.b16 %v660
        %v1435 = vunpack.c.l.b16 %v661
        %v1436 = vunpack.c.h.b16 %v661
        %v1437 = vunpack.c.l.b16 %v662
        %v1438 = vunpack.c.h.b16 %v662
        %v1439 = vunpack.c.l.b16 %v663
        %v1440 = vunpack.c.h.b16 %v663
        %v1441 = vunpack.c.l.b16 %v664
        %v1442 = vunpack.c.h.b16 %v664
        %v1443 = vunpack.c.l.b16 %v665
        %v1444 = vunpack.c.h.b16 %v665
        %v1445 = vunpack.c.l.b16 %v666
        %v1446 = vunpack.c.h.b16 %v666
        %v1447 = vunpack.c.l.b16 %v667
        %v1448 = vunpack.c.h.b16 %v667
        %v1449 = vunpack.c.l.b16 %v668
        %v1450 = vunpack.c.h.b16 %v668
        %v1451 = vpack.c.b16 %v947, %v939
        %v1452 = vpack.c.b16 %v948, %v940
        %v1453 = vpack.c.b16 %v949, %v941
        %v1454 = vpack.c.b16 %v950, %v942
        %v1455 = vpack.c.b16 %v951, %v943
        %v1456 = vpack.c.b16 %v952, %v944
        %v1457 = vpack.c.b16 %v953, %v945
        %v1458 = vpack.c.b16 %v954, %v946
        %v1459 = vpack.c.b16 %v963, %v955
        %v1460 = vpack.c.b16 %v964, %v956
        %v1461 = vpack.c.b16 %v965, %v957
        %v1462 = vpack.c.b16 %v966, %v958
        %v1463 = vpack.c.b16 %v967, %v959
        %v1464 = vpack.c.b16 %v968, %v960
        %v1465 = vpack.c.b16 %v969, %v961
        %v1466 = vpack.c.b16 %v970, %v962
        %v1467 = vpack.c.b16 %v979, %v971
        %v1468 = vpack.c.b16 %v980, %v972
        %v1469 = vpack.c.b16 %v981, %v973
        %v1470 = vpack.c.b16 %v982, %v974
        %v1471 = vpack.c.b16 %v983, %v975
        %v1472 = vpack.c.b16 %v984, %v976
        %v1473 = vpack.c.b16 %v985, %v977
        %v1474 = vpack.c.b16 %v986, %v978
        %v1475 = vpack.c.b16 %v995, %v987
        %v1476 = vpack.c.b16 %v996, %v988
        %v1477 = vpack.c.b16 %v997, %v989
        %v1478 = vpack.c.b16 %v998, %v990
        %v1479 = vpack.c.b16 %v999, %v991
        %v1480 = vpack.c.b16 %v1000, %v992
        %v1481 = vpack.c.b16 %v1001, %v993
        %v1482 = vpack.c.b16 %v1002, %v994
        %v1483 = vpack.c.b16 %v1011, %v1003
        %v1484 = vpack.c.b16 %v1012, %v1004
        %v1485 = vpack.c.b16 %v1013, %v1005
        %v1486 = vpack.c.b16 %v1014, %v1006
        %v1487 = vpack.c.b16 %v1015, %v1007
        %v1488 = vpack.c.b16 %v1016, %v1008
        %v1489 = vpack.c.b16 %v1017, %v1009
        %v1490 = vpack.c.b16 %v1018, %v1010
        %v1491 = vpack.c.b16 %v1027, %v1019
        %v1492 = vpack.c.b16 %v1028, %v1020
        %v1493 = vpack.c.b16 %v1029, %v1021
        %v1494 = vpack.c.b16 %v1030, %v1022
        %v1495 = vpack.c.b16 %v1031, %v1023
        %v1496 = vpack.c.b16 %v1032, %v1024
        %v1497 = vpack.c.b16 %v1033, %v1025
        %v1498 = vpack.c.b16 %v1034, %v1026
        %v1499 = vpack.c.b16 %v1043, %v1035
        %v1500 = vpack.c.b16 %v1044, %v1036
        %v1501 = vpack.c.b16 %v1045, %v1037
        %v1502 = vpack.c.b16 %v1046, %v1038
        %v1503 = vpack.c.b16 %v1047, %v1039
        %v1504 = vpack.c.b16 %v1048, %v1040
        %v1505 = vpack.c.b16 %v1049, %v1041
        %v1506 = vpack.c.b16 %v1050, %v1042
        %v1507 = vpack.c.b16 %v1059, %v1051
        %v1508 = vpack.c.b16 %v1060, %v1052
        %v1509 = vpack.c.b16 %v1061, %v1053
        %v1510 = vpack.c.b16 %v1062, %v1054
        %v1511 = vpack.c.b16 %v1063, %v1055
        %v1512 = vpack.c.b16 %v1064, %v1056
        %v1513 = vpack.c.b16 %v1065, %v1057
        %v1514 = vpack.c.b16 %v1066, %v1058
        %v1515 = vpack.c.b16 %v1075, %v1067
        %v1516 = vpack.c.b16 %v1076, %v1068
        %v1517 = vpack.c.b16 %v1077, %v1069
        %v1518 = vpack.c.b16 %v1078, %v1070
        %v1519 = vpack.c.b16 %v1079, %v1071
        %v1520 = vpack.c.b16 %v1080, %v1072
        %v1521 = vpack.c.b16 %v1081, %v1073
        %v1522 = vpack.c.b16 %v1082, %v1074
        %v1523 = vpack.c.b16 %v1091, %v1083
        %v1524 = vpack.c.b16 %v1092, %v1084
        %v1525 = vpack.c.b16 %v1093, %v1085
        %v1526 = vpack.c.b16 %v1094, %v1086
        %v1527 = vpack.c.b16 %v1095, %v1087
        %v1528 = vpack.c.b16 %v1096, %v1088
        %v1529 = vpack.c.b16 %v1097, %v1089
        %v1530 = vpack.c.b16 %v1098, %v1090
        %v1531 = vpack.c.b16 %v1107, %v1099
        %v1532 = vpack.c.b16 %v1108, %v1100
        %v1533 = vpack.c.b16 %v1109, %v1101
        %v1534 = vpack.c.b16 %v1110, %v1102
        %v1535 = vpack.c.b16 %v1111, %v1103
        %v1536 = vpack.c.b16 %v1112, %v1104
        %v1537 = vpack.c.b16 %v1113, %v1105
        %v1538 = vpack.c.b16 %v1114, %v1106
        %v1539 = vpack.c.b16 %v1123, %v1115
        %v1540 = vpack.c.b16 %v1124, %v1116
        %v1541 = vpack.c.b16 %v1125, %v1117
        %v1542 = vpack.c.b16 %v1126, %v1118
        %v1543 = vpack.c.b16 %v1127, %v1119
        %v1544 = vpack.c.b16 %v1128, %v1120
        %v1545 = vpack.c.b16 %v1129, %v1121
        %v1546 = vpack.c.b16 %v1130, %v1122
        %v1547 = vpack.c.b16 %v1139, %v1131
        %v1548 = vpack.c.b16 %v1140, %v1132
        %v1549 = vpack.c.b16 %v1141, %v1133
        %v1550 = vpack.c.b16 %v1142, %v1134
        %v1551 = vpack.c.b16 %v1143, %v1135
        %v1552 = vpack.c.b16 %v1144, %v1136
        %v1553 = vpack.c.b16 %v1145, %v1137
        %v1554 = vpack.c.b16 %v1146, %v1138
        %v1555 = vpack.c.b16 %v1155, %v1147
        %v1556 = vpack.c.b16 %v1156, %v1148
        %v1557 = vpack.c.b16 %v1157, %v1149
        %v1558 = vpack.c.b16 %v1158, %v1150
        %v1559 = vpack.c.b16 %v1159, %v1151
        %v1560 = vpack.c.b16 %v1160, %v1152
        %v1561 = vpack.c.b16 %v1161, %v1153
        %v1562 = vpack.c.b16 %v1162, %v1154
        %v1563 = vpack.c.b16 %v1171, %v1163
        %v1564 = vpack.c.b16 %v1172, %v1164
        %v1565 = vpack.c.b16 %v1173, %v1165
        %v1566 = vpack.c.b16 %v1174, %v1166
        %v1567 = vpack.c.b16 %v1175, %v1167
        %v1568 = vpack.c.b16 %v1176, %v1168
        %v1569 = vpack.c.b16 %v1177, %v1169
        %v1570 = vpack.c.b16 %v1178, %v1170
        %v1571 = vpack.c.b16 %v1187, %v1179
        %v1572 = vpack.c.b16 %v1188, %v1180
        %v1573 = vpack.c.b16 %v1189, %v1181
        %v1574 = vpack.c.b16 %v1190, %v1182
        %v1575 = vpack.c.b16 %v1191, %v1183
        %v1576 = vpack.c.b16 %v1192, %v1184
        %v1577 = vpack.c.b16 %v1193, %v1185
        %v1578 = vpack.c.b16 %v1194, %v1186
        %v1579 = vpack.c.b16 %v1203, %v1195
        %v1580 = vpack.c.b16 %v1204, %v1196
        %v1581 = vpack.c.b16 %v1205, %v1197
        %v1582 = vpack.c.b16 %v1206, %v1198
        %v1583 = vpack.c.b16 %v1207, %v1199
        %v1584 = vpack.c.b16 %v1208, %v1200
        %v1585 = vpack.c.b16 %v1209, %v1201
        %v1586 = vpack.c.b16 %v1210, %v1202
        %v1587 = vpack.c.b16 %v1219, %v1211
        %v1588 = vpack.c.b16 %v1220, %v1212
        %v1589 = vpack.c.b16 %v1221, %v1213
        %v1590 = vpack.c.b16 %v1222, %v1214
        %v1591 = vpack.c.b16 %v1223, %v1215
        %v1592 = vpack.c.b16 %v1224, %v1216
        %v1593 = vpack.c.b16 %v1225, %v1217
        %v1594 = vpack.c.b16 %v1226, %v1218
        %v1595 = vpack.c.b16 %v1235, %v1227
        %v1596 = vpack.c.b16 %v1236, %v1228
        %v1597 = vpack.c.b16 %v1237, %v1229
        %v1598 = vpack.c.b16 %v1238, %v1230
        %v1599 = vpack.c.b16 %v1239, %v1231
        %v1600 = vpack.c.b16 %v1240, %v1232
        %v1601 = vpack.c.b16 %v1241, %v1233
        %v1602 = vpack.c.b16 %v1242, %v1234
        %v1603 = vpack.c.b16 %v1251, %v1243
        %v1604 = vpack.c.b16 %v1252, %v1244
        %v1605 = vpack.c.b16 %v1253, %v1245
        %v1606 = vpack.c.b16 %v1254, %v1246
        %v1607 = vpack.c.b16 %v1255, %v1247
        %v1608 = vpack.c.b16 %v1256, %v1248
        %v1609 = vpack.c.b16 %v1257, %v1249
        %v1610 = vpack.c.b16 %v1258, %v1250
        %v1611 = vpack.c.b16 %v1267, %v1259
        %v1612 = vpack.c.b16 %v1268, %v1260
        %v1613 = vpack.c.b16 %v1269, %v1261
        %v1614 = vpack.c.b16 %v1270, %v1262
        %v1615 = vpack.c.b16 %v1271, %v1263
        %v1616 = vpack.c.b16 %v1272, %v1264
        %v1617 = vpack.c.b16 %v1273, %v1265
        %v1618 = vpack.c.b16 %v1274, %v1266
        %v1619 = vpack.c.b16 %v1283, %v1275
        %v1620 = vpack.c.b16 %v1284, %v1276
        %v1621 = vpack.c.b16 %v1285, %v1277
        %v1622 = vpack.c.b16 %v1286, %v1278
        %v1623 = vpack.c.b16 %v1287, %v1279
        %v1624 = vpack.c.b16 %v1288, %v1280
        %v1625 = vpack.c.b16 %v1289, %v1281
        %v1626 = vpack.c.b16 %v1290, %v1282
        %v1627 = vpack.c.b16 %v1299, %v1291
        %v1628 = vpack.c.b16 %v1300, %v1292
        %v1629 = vpack.c.b16 %v1301, %v1293
        %v1630 = vpack.c.b16 %v1302, %v1294
        %v1631 = vpack.c.b16 %v1303, %v1295
        %v1632 = vpack.c.b16 %v1304, %v1296
        %v1633 = vpack.c.b16 %v1305, %v1297
        %v1634 = vpack.c.b16 %v1306, %v1298
        %v1635 = vpack.c.b16 %v1315, %v1307
        %v1636 = vpack.c.b16 %v1316, %v1308
        %v1637 = vpack.c.b16 %v1317, %v1309
        %v1638 = vpack.c.b16 %v1318, %v1310
        %v1639 = vpack.c.b16 %v1319, %v1311
        %v1640 = vpack.c.b16 %v1320, %v1312
        %v1641 = vpack.c.b16 %v1321, %v1313
        %v1642 = vpack.c.b16 %v1322, %v1314
        %v1643 = vpack.c.b16 %v1331, %v1323
        %v1644 = vpack.c.b16 %v1332, %v1324
        %v1645 = vpack.c.b16 %v1333, %v1325
        %v1646 = vpack.c.b16 %v1334, %v1326
        %v1647 = vpack.c.b16 %v1335, %v1327
        %v1648 = vpack.c.b16 %v1336, %v1328
        %v1649 = vpack.c.b16 %v1337, %v1329
        %v1650 = vpack.c.b16 %v1338, %v1330
        %v1651 = vpack.c.b16 %v1347, %v1339
        %v1652 = vpack.c.b16 %v1348, %v1340
        %v1653 = vpack.c.b16 %v1349, %v1341
        %v1654 = vpack.c.b16 %v1350, %v1342
        %v1655 = vpack.c.b16 %v1351, %v1343
        %v1656 = vpack.c.b16 %v1352, %v1344
        %v1657 = vpack.c.b16 %v1353, %v1345
        %v1658 = vpack.c.b16 %v1354, %v1346
        %v1659 = vpack.c.b16 %v1363, %v1355
        %v1660 = vpack.c.b16 %v1364, %v1356
        %v1661 = vpack.c.b16 %v1365, %v1357
        %v1662 = vpack.c.b16 %v1366, %v1358
        %v1663 = vpack.c.b16 %v1367, %v1359
        %v1664 = vpack.c.b16 %v1368, %v1360
        %v1665 = vpack.c.b16 %v1369, %v1361
        %v1666 = vpack.c.b16 %v1370, %v1362
        %v1667 = vpack.c.b16 %v1379, %v1371
        %v1668 = vpack.c.b16 %v1380, %v1372
        %v1669 = vpack.c.b16 %v1381, %v1373
        %v1670 = vpack.c.b16 %v1382, %v1374
        %v1671 = vpack.c.b16 %v1383, %v1375
        %v1672 = vpack.c.b16 %v1384, %v1376
        %v1673 = vpack.c.b16 %v1385, %v1377
        %v1674 = vpack.c.b16 %v1386, %v1378
        %v1675 = vpack.c.b16 %v1395, %v1387
        %v1676 = vpack.c.b16 %v1396, %v1388
        %v1677 = vpack.c.b16 %v1397, %v1389
        %v1678 = vpack.c.b16 %v1398, %v1390
        %v1679 = vpack.c.b16 %v1399, %v1391
        %v1680 = vpack.c.b16 %v1400, %v1392
        %v1681 = vpack.c.b16 %v1401, %v1393
        %v1682 = vpack.c.b16 %v1402, %v1394
        %v1683 = vpack.c.b16 %v1411, %v1403
        %v1684 = vpack.c.b16 %v1412, %v1404
        %v1685 = vpack.c.b16 %v1413, %v1405
        %v1686 = vpack.c.b16 %v1414, %v1406
        %v1687 = vpack.c.b16 %v1415, %v1407
        %v1688 = vpack.c.b16 %v1416, %v1408
        %v1689 = vpack.c.b16 %v1417, %v1409
        %v1690 = vpack.c.b16 %v1418, %v1410
        %v1691 = vpack.c.b16 %v1427, %v1419
        %v1692 = vpack.c.b16 %v1428, %v1420
        %v1693 = vpack.c.b16 %v1429, %v1421
        %v1694 = vpack.c.b16 %v1430, %v1422
        %v1695 = vpack.c.b16 %v1431, %v1423
        %v1696 = vpack.c.b16 %v1432, %v1424
        %v1697 = vpack.c.b16 %v1433, %v1425
        %v1698 = vpack.c.b16 %v1434, %v1426
        %v1699 = vpack.c.b16 %v1443, %v1435
        %v1700 = vpack.c.b16 %v1444, %v1436
        %v1701 = vpack.c.b16 %v1445, %v1437
        %v1702 = vpack.c.b16 %v1446, %v1438
        %v1703 = vpack.c.b16 %v1447, %v1439
        %v1704 = vpack.c.b16 %v1448, %v1440
        %v1705 = vpack.c.b16 %v1449, %v1441
        %v1706 = vpack.c.b16 %v1450, %v1442
        %1963 = vmatpush.bf16.msra.mxu0 %v1507
        %1964 = vmatpush.bf16.msra.mxu0 %v1499
        %1965 = vmatpush.bf16.msra.mxu0 %v1491
        %1966 = vmatpush.bf16.msra.mxu0 %v1483
        %1967 = vmatpush.bf16.msra.mxu0 %v1475
        %1968 = vmatpush.bf16.msra.mxu0 %v1467
        %1969 = vmatpush.bf16.msra.mxu0 %v1459
        %1970 = vmatpush.bf16.msra.mxu0 %v1451
        %1971 = vmatmul.bf16.gmra.mxu0 %v675
        %v1972 = vpop.f32.mrf.mxu0
        %v1973 = vadd.f32 0.0, %v1972
        %v1974 = vpop.f32.mrf.mxu0
        %1975 = vdwg.mxu0
        %1976 = vmatpush.bf16.msra.mxu0 %v1571
        %1977 = vmatpush.bf16.msra.mxu0 %v1563
        %1978 = vmatpush.bf16.msra.mxu0 %v1555
        %1979 = vmatpush.bf16.msra.mxu0 %v1547
        %1980 = vmatpush.bf16.msra.mxu0 %v1539
        %1981 = vmatpush.bf16.msra.mxu0 %v1531
        %1982 = vmatpush.bf16.msra.mxu0 %v1523
        %1983 = vmatpush.bf16.msra.mxu0 %v1515
        %1984 = vmatmul.bf16.gmra.mxu0 %v676
        %v1985 = vpop.f32.mrf.mxu0
        %v1986 = vadd.f32 %v1973, %v1985
        %v1987 = vpop.f32.mrf.mxu0
        %1988 = vdwg.mxu0
        %1989 = vmatpush.bf16.msra.mxu0 %v1635
        %1990 = vmatpush.bf16.msra.mxu0 %v1627
        %1991 = vmatpush.bf16.msra.mxu0 %v1619
        %1992 = vmatpush.bf16.msra.mxu0 %v1611
        %1993 = vmatpush.bf16.msra.mxu0 %v1603
        %1994 = vmatpush.bf16.msra.mxu0 %v1595
        %1995 = vmatpush.bf16.msra.mxu0 %v1587
        %1996 = vmatpush.bf16.msra.mxu0 %v1579
        %1997 = vmatmul.bf16.gmra.mxu0 %v677
        %v1998 = vpop.f32.mrf.mxu0
        %v1999 = vadd.f32 %v1986, %v1998
        %v2000 = vpop.f32.mrf.mxu0
        %2001 = vdwg.mxu0
        %2002 = vmatpush.bf16.msra.mxu0 %v1699
        %2003 = vmatpush.bf16.msra.mxu0 %v1691
        %2004 = vmatpush.bf16.msra.mxu0 %v1683
        %2005 = vmatpush.bf16.msra.mxu0 %v1675
        %2006 = vmatpush.bf16.msra.mxu0 %v1667
        %2007 = vmatpush.bf16.msra.mxu0 %v1659
        %2008 = vmatpush.bf16.msra.mxu0 %v1651
        %2009 = vmatpush.bf16.msra.mxu0 %v1643
        %2010 = vmatmul.bf16.gmra.mxu0 %v678
        %v2011 = vpop.f32.mrf.mxu0
        %v2012 = vadd.f32 %v1999, %v2011
        %v2013 = vpop.f32.mrf.mxu0
        %2014 = vdwg.mxu0
        %2015 = vmatpush.bf16.msra.mxu0 %v1508
        %2016 = vmatpush.bf16.msra.mxu0 %v1500
        %2017 = vmatpush.bf16.msra.mxu0 %v1492
        %2018 = vmatpush.bf16.msra.mxu0 %v1484
        %2019 = vmatpush.bf16.msra.mxu0 %v1476
        %2020 = vmatpush.bf16.msra.mxu0 %v1468
        %2021 = vmatpush.bf16.msra.mxu0 %v1460
        %2022 = vmatpush.bf16.msra.mxu0 %v1452
        %2023 = vmatmul.bf16.gmra.mxu0 %v675
        %v2024 = vpop.f32.mrf.mxu0
        %v2025 = vadd.f32 0.0, %v2024
        %v2026 = vpop.f32.mrf.mxu0
        %2027 = vdwg.mxu0
        %2028 = vmatpush.bf16.msra.mxu0 %v1572
        %2029 = vmatpush.bf16.msra.mxu0 %v1564
        %2030 = vmatpush.bf16.msra.mxu0 %v1556
        %2031 = vmatpush.bf16.msra.mxu0 %v1548
        %2032 = vmatpush.bf16.msra.mxu0 %v1540
        %2033 = vmatpush.bf16.msra.mxu0 %v1532
        %2034 = vmatpush.bf16.msra.mxu0 %v1524
        %2035 = vmatpush.bf16.msra.mxu0 %v1516
        %2036 = vmatmul.bf16.gmra.mxu0 %v676
        %v2037 = vpop.f32.mrf.mxu0
        %v2038 = vadd.f32 %v2025, %v2037
        %v2039 = vpop.f32.mrf.mxu0
        %2040 = vdwg.mxu0
        %2041 = vmatpush.bf16.msra.mxu0 %v1636
        %2042 = vmatpush.bf16.msra.mxu0 %v1628
        %2043 = vmatpush.bf16.msra.mxu0 %v1620
        %2044 = vmatpush.bf16.msra.mxu0 %v1612
        %2045 = vmatpush.bf16.msra.mxu0 %v1604
        %2046 = vmatpush.bf16.msra.mxu0 %v1596
        %2047 = vmatpush.bf16.msra.mxu0 %v1588
        %2048 = vmatpush.bf16.msra.mxu0 %v1580
        %2049 = vmatmul.bf16.gmra.mxu0 %v677
        %v2050 = vpop.f32.mrf.mxu0
        %v2051 = vadd.f32 %v2038, %v2050
        %v2052 = vpop.f32.mrf.mxu0
        %2053 = vdwg.mxu0
        %2054 = vmatpush.bf16.msra.mxu0 %v1700
        %2055 = vmatpush.bf16.msra.mxu0 %v1692
        %2056 = vmatpush.bf16.msra.mxu0 %v1684
        %2057 = vmatpush.bf16.msra.mxu0 %v1676
        %2058 = vmatpush.bf16.msra.mxu0 %v1668
        %2059 = vmatpush.bf16.msra.mxu0 %v1660
        %2060 = vmatpush.bf16.msra.mxu0 %v1652
        %2061 = vmatpush.bf16.msra.mxu0 %v1644
        %2062 = vmatmul.bf16.gmra.mxu0 %v678
        %v2063 = vpop.f32.mrf.mxu0
        %v2064 = vadd.f32 %v2051, %v2063
        %v2065 = vpop.f32.mrf.mxu0
        %2066 = vdwg.mxu0
        %2067 = vmatpush.bf16.msra.mxu0 %v1509
        %2068 = vmatpush.bf16.msra.mxu0 %v1501
        %2069 = vmatpush.bf16.msra.mxu0 %v1493
        %2070 = vmatpush.bf16.msra.mxu0 %v1485
        %2071 = vmatpush.bf16.msra.mxu0 %v1477
        %2072 = vmatpush.bf16.msra.mxu0 %v1469
        %2073 = vmatpush.bf16.msra.mxu0 %v1461
        %2074 = vmatpush.bf16.msra.mxu0 %v1453
        %2075 = vmatmul.bf16.gmra.mxu0 %v675
        %v2076 = vpop.f32.mrf.mxu0
        %v2077 = vadd.f32 0.0, %v2076
        %v2078 = vpop.f32.mrf.mxu0
        %2079 = vdwg.mxu0
        %2080 = vmatpush.bf16.msra.mxu0 %v1573
        %2081 = vmatpush.bf16.msra.mxu0 %v1565
        %2082 = vmatpush.bf16.msra.mxu0 %v1557
        %2083 = vmatpush.bf16.msra.mxu0 %v1549
        %2084 = vmatpush.bf16.msra.mxu0 %v1541
        %2085 = vmatpush.bf16.msra.mxu0 %v1533
        %2086 = vmatpush.bf16.msra.mxu0 %v1525
        %2087 = vmatpush.bf16.msra.mxu0 %v1517
        %2088 = vmatmul.bf16.gmra.mxu0 %v676
        %v2089 = vpop.f32.mrf.mxu0
        %v2090 = vadd.f32 %v2077, %v2089
        %v2091 = vpop.f32.mrf.mxu0
        %2092 = vdwg.mxu0
        %2093 = vmatpush.bf16.msra.mxu0 %v1637
        %2094 = vmatpush.bf16.msra.mxu0 %v1629
        %2095 = vmatpush.bf16.msra.mxu0 %v1621
        %2096 = vmatpush.bf16.msra.mxu0 %v1613
        %2097 = vmatpush.bf16.msra.mxu0 %v1605
        %2098 = vmatpush.bf16.msra.mxu0 %v1597
        %2099 = vmatpush.bf16.msra.mxu0 %v1589
        %2100 = vmatpush.bf16.msra.mxu0 %v1581
        %2101 = vmatmul.bf16.gmra.mxu0 %v677
        %v2102 = vpop.f32.mrf.mxu0
        %v2103 = vadd.f32 %v2090, %v2102
        %v2104 = vpop.f32.mrf.mxu0
        %2105 = vdwg.mxu0
        %2106 = vmatpush.bf16.msra.mxu0 %v1701
        %2107 = vmatpush.bf16.msra.mxu0 %v1693
        %2108 = vmatpush.bf16.msra.mxu0 %v1685
        %2109 = vmatpush.bf16.msra.mxu0 %v1677
        %2110 = vmatpush.bf16.msra.mxu0 %v1669
        %2111 = vmatpush.bf16.msra.mxu0 %v1661
        %2112 = vmatpush.bf16.msra.mxu0 %v1653
        %2113 = vmatpush.bf16.msra.mxu0 %v1645
        %2114 = vmatmul.bf16.gmra.mxu0 %v678
        %v2115 = vpop.f32.mrf.mxu0
        %v2116 = vadd.f32 %v2103, %v2115
        %v2117 = vpop.f32.mrf.mxu0
        %2118 = vdwg.mxu0
        %2119 = vmatpush.bf16.msra.mxu0 %v1510
        %2120 = vmatpush.bf16.msra.mxu0 %v1502
        %2121 = vmatpush.bf16.msra.mxu0 %v1494
        %2122 = vmatpush.bf16.msra.mxu0 %v1486
        %2123 = vmatpush.bf16.msra.mxu0 %v1478
        %2124 = vmatpush.bf16.msra.mxu0 %v1470
        %2125 = vmatpush.bf16.msra.mxu0 %v1462
        %2126 = vmatpush.bf16.msra.mxu0 %v1454
        %2127 = vmatmul.bf16.gmra.mxu0 %v675
        %v2128 = vpop.f32.mrf.mxu0
        %v2129 = vadd.f32 0.0, %v2128
        %v2130 = vpop.f32.mrf.mxu0
        %2131 = vdwg.mxu0
        %2132 = vmatpush.bf16.msra.mxu0 %v1574
        %2133 = vmatpush.bf16.msra.mxu0 %v1566
        %2134 = vmatpush.bf16.msra.mxu0 %v1558
        %2135 = vmatpush.bf16.msra.mxu0 %v1550
        %2136 = vmatpush.bf16.msra.mxu0 %v1542
        %2137 = vmatpush.bf16.msra.mxu0 %v1534
        %2138 = vmatpush.bf16.msra.mxu0 %v1526
        %2139 = vmatpush.bf16.msra.mxu0 %v1518
        %2140 = vmatmul.bf16.gmra.mxu0 %v676
        %v2141 = vpop.f32.mrf.mxu0
        %v2142 = vadd.f32 %v2129, %v2141
        %v2143 = vpop.f32.mrf.mxu0
        %2144 = vdwg.mxu0
        %2145 = vmatpush.bf16.msra.mxu0 %v1638
        %2146 = vmatpush.bf16.msra.mxu0 %v1630
        %2147 = vmatpush.bf16.msra.mxu0 %v1622
        %2148 = vmatpush.bf16.msra.mxu0 %v1614
        %2149 = vmatpush.bf16.msra.mxu0 %v1606
        %2150 = vmatpush.bf16.msra.mxu0 %v1598
        %2151 = vmatpush.bf16.msra.mxu0 %v1590
        %2152 = vmatpush.bf16.msra.mxu0 %v1582
        %2153 = vmatmul.bf16.gmra.mxu0 %v677
        %v2154 = vpop.f32.mrf.mxu0
        %v2155 = vadd.f32 %v2142, %v2154
        %v2156 = vpop.f32.mrf.mxu0
        %2157 = vdwg.mxu0
        %2158 = vmatpush.bf16.msra.mxu0 %v1702
        %2159 = vmatpush.bf16.msra.mxu0 %v1694
        %2160 = vmatpush.bf16.msra.mxu0 %v1686
        %2161 = vmatpush.bf16.msra.mxu0 %v1678
        %2162 = vmatpush.bf16.msra.mxu0 %v1670
        %2163 = vmatpush.bf16.msra.mxu0 %v1662
        %2164 = vmatpush.bf16.msra.mxu0 %v1654
        %2165 = vmatpush.bf16.msra.mxu0 %v1646
        %2166 = vmatmul.bf16.gmra.mxu0 %v678
        %v2167 = vpop.f32.mrf.mxu0
        %v2168 = vadd.f32 %v2155, %v2167
        %v2169 = vpop.f32.mrf.mxu0
        %2170 = vdwg.mxu0
        %2171 = vmatpush.bf16.msra.mxu0 %v1511
        %2172 = vmatpush.bf16.msra.mxu0 %v1503
        %2173 = vmatpush.bf16.msra.mxu0 %v1495
        %2174 = vmatpush.bf16.msra.mxu0 %v1487
        %2175 = vmatpush.bf16.msra.mxu0 %v1479
        %2176 = vmatpush.bf16.msra.mxu0 %v1471
        %2177 = vmatpush.bf16.msra.mxu0 %v1463
        %2178 = vmatpush.bf16.msra.mxu0 %v1455
        %2179 = vmatmul.bf16.gmra.mxu0 %v675
        %v2180 = vpop.f32.mrf.mxu0
        %v2181 = vadd.f32 0.0, %v2180
        %v2182 = vpop.f32.mrf.mxu0
        %2183 = vdwg.mxu0
        %2184 = vmatpush.bf16.msra.mxu0 %v1575
        %2185 = vmatpush.bf16.msra.mxu0 %v1567
        %2186 = vmatpush.bf16.msra.mxu0 %v1559
        %2187 = vmatpush.bf16.msra.mxu0 %v1551
        %2188 = vmatpush.bf16.msra.mxu0 %v1543
        %2189 = vmatpush.bf16.msra.mxu0 %v1535
        %2190 = vmatpush.bf16.msra.mxu0 %v1527
        %2191 = vmatpush.bf16.msra.mxu0 %v1519
        %2192 = vmatmul.bf16.gmra.mxu0 %v676
        %v2193 = vpop.f32.mrf.mxu0
        %v2194 = vadd.f32 %v2181, %v2193
        %v2195 = vpop.f32.mrf.mxu0
        %2196 = vdwg.mxu0
        %2197 = vmatpush.bf16.msra.mxu0 %v1639
        %2198 = vmatpush.bf16.msra.mxu0 %v1631
        %2199 = vmatpush.bf16.msra.mxu0 %v1623
        %2200 = vmatpush.bf16.msra.mxu0 %v1615
        %2201 = vmatpush.bf16.msra.mxu0 %v1607
        %2202 = vmatpush.bf16.msra.mxu0 %v1599
        %2203 = vmatpush.bf16.msra.mxu0 %v1591
        %2204 = vmatpush.bf16.msra.mxu0 %v1583
        %2205 = vmatmul.bf16.gmra.mxu0 %v677
        %v2206 = vpop.f32.mrf.mxu0
        %v2207 = vadd.f32 %v2194, %v2206
        %v2208 = vpop.f32.mrf.mxu0
        %2209 = vdwg.mxu0
        %2210 = vmatpush.bf16.msra.mxu0 %v1703
        %2211 = vmatpush.bf16.msra.mxu0 %v1695
        %2212 = vmatpush.bf16.msra.mxu0 %v1687
        %2213 = vmatpush.bf16.msra.mxu0 %v1679
        %2214 = vmatpush.bf16.msra.mxu0 %v1671
        %2215 = vmatpush.bf16.msra.mxu0 %v1663
        %2216 = vmatpush.bf16.msra.mxu0 %v1655
        %2217 = vmatpush.bf16.msra.mxu0 %v1647
        %2218 = vmatmul.bf16.gmra.mxu0 %v678
        %v2219 = vpop.f32.mrf.mxu0
        %v2220 = vadd.f32 %v2207, %v2219
        %v2221 = vpop.f32.mrf.mxu0
        %2222 = vdwg.mxu0
        %2223 = vmatpush.bf16.msra.mxu0 %v1512
        %2224 = vmatpush.bf16.msra.mxu0 %v1504
        %2225 = vmatpush.bf16.msra.mxu0 %v1496
        %2226 = vmatpush.bf16.msra.mxu0 %v1488
        %2227 = vmatpush.bf16.msra.mxu0 %v1480
        %2228 = vmatpush.bf16.msra.mxu0 %v1472
        %2229 = vmatpush.bf16.msra.mxu0 %v1464
        %2230 = vmatpush.bf16.msra.mxu0 %v1456
        %2231 = vmatmul.bf16.gmra.mxu0 %v675
        %v2232 = vpop.f32.mrf.mxu0
        %v2233 = vadd.f32 0.0, %v2232
        %v2234 = vpop.f32.mrf.mxu0
        %2235 = vdwg.mxu0
        %2236 = vmatpush.bf16.msra.mxu0 %v1576
        %2237 = vmatpush.bf16.msra.mxu0 %v1568
        %2238 = vmatpush.bf16.msra.mxu0 %v1560
        %2239 = vmatpush.bf16.msra.mxu0 %v1552
        %2240 = vmatpush.bf16.msra.mxu0 %v1544
        %2241 = vmatpush.bf16.msra.mxu0 %v1536
        %2242 = vmatpush.bf16.msra.mxu0 %v1528
        %2243 = vmatpush.bf16.msra.mxu0 %v1520
        %2244 = vmatmul.bf16.gmra.mxu0 %v676
        %v2245 = vpop.f32.mrf.mxu0
        %v2246 = vadd.f32 %v2233, %v2245
        %v2247 = vpop.f32.mrf.mxu0
        %2248 = vdwg.mxu0
        %2249 = vmatpush.bf16.msra.mxu0 %v1640
        %2250 = vmatpush.bf16.msra.mxu0 %v1632
        %2251 = vmatpush.bf16.msra.mxu0 %v1624
        %2252 = vmatpush.bf16.msra.mxu0 %v1616
        %2253 = vmatpush.bf16.msra.mxu0 %v1608
        %2254 = vmatpush.bf16.msra.mxu0 %v1600
        %2255 = vmatpush.bf16.msra.mxu0 %v1592
        %2256 = vmatpush.bf16.msra.mxu0 %v1584
        %2257 = vmatmul.bf16.gmra.mxu0 %v677
        %v2258 = vpop.f32.mrf.mxu0
        %v2259 = vadd.f32 %v2246, %v2258
        %v2260 = vpop.f32.mrf.mxu0
        %2261 = vdwg.mxu0
        %2262 = vmatpush.bf16.msra.mxu0 %v1704
        %2263 = vmatpush.bf16.msra.mxu0 %v1696
        %2264 = vmatpush.bf16.msra.mxu0 %v1688
        %2265 = vmatpush.bf16.msra.mxu0 %v1680
        %2266 = vmatpush.bf16.msra.mxu0 %v1672
        %2267 = vmatpush.bf16.msra.mxu0 %v1664
        %2268 = vmatpush.bf16.msra.mxu0 %v1656
        %2269 = vmatpush.bf16.msra.mxu0 %v1648
        %2270 = vmatmul.bf16.gmra.mxu0 %v678
        %v2271 = vpop.f32.mrf.mxu0
        %v2272 = vadd.f32 %v2259, %v2271
        %v2273 = vpop.f32.mrf.mxu0
        %2274 = vdwg.mxu0
        %2275 = vmatpush.bf16.msra.mxu0 %v1513
        %2276 = vmatpush.bf16.msra.mxu0 %v1505
        %2277 = vmatpush.bf16.msra.mxu0 %v1497
        %2278 = vmatpush.bf16.msra.mxu0 %v1489
        %2279 = vmatpush.bf16.msra.mxu0 %v1481
        %2280 = vmatpush.bf16.msra.mxu0 %v1473
        %2281 = vmatpush.bf16.msra.mxu0 %v1465
        %2282 = vmatpush.bf16.msra.mxu0 %v1457
        %2283 = vmatmul.bf16.gmra.mxu0 %v675
        %v2284 = vpop.f32.mrf.mxu0
        %v2285 = vadd.f32 0.0, %v2284
        %v2286 = vpop.f32.mrf.mxu0
        %2287 = vdwg.mxu0
        %2288 = vmatpush.bf16.msra.mxu0 %v1577
        %2289 = vmatpush.bf16.msra.mxu0 %v1569
        %2290 = vmatpush.bf16.msra.mxu0 %v1561
        %2291 = vmatpush.bf16.msra.mxu0 %v1553
        %2292 = vmatpush.bf16.msra.mxu0 %v1545
        %2293 = vmatpush.bf16.msra.mxu0 %v1537
        %2294 = vmatpush.bf16.msra.mxu0 %v1529
        %2295 = vmatpush.bf16.msra.mxu0 %v1521
        %2296 = vmatmul.bf16.gmra.mxu0 %v676
        %v2297 = vpop.f32.mrf.mxu0
        %v2298 = vadd.f32 %v2285, %v2297
        %v2299 = vpop.f32.mrf.mxu0
        %2300 = vdwg.mxu0
        %2301 = vmatpush.bf16.msra.mxu0 %v1641
        %2302 = vmatpush.bf16.msra.mxu0 %v1633
        %2303 = vmatpush.bf16.msra.mxu0 %v1625
        %2304 = vmatpush.bf16.msra.mxu0 %v1617
        %2305 = vmatpush.bf16.msra.mxu0 %v1609
        %2306 = vmatpush.bf16.msra.mxu0 %v1601
        %2307 = vmatpush.bf16.msra.mxu0 %v1593
        %2308 = vmatpush.bf16.msra.mxu0 %v1585
        %2309 = vmatmul.bf16.gmra.mxu0 %v677
        %v2310 = vpop.f32.mrf.mxu0
        %v2311 = vadd.f32 %v2298, %v2310
        %v2312 = vpop.f32.mrf.mxu0
        %2313 = vdwg.mxu0
        %2314 = vmatpush.bf16.msra.mxu0 %v1705
        %2315 = vmatpush.bf16.msra.mxu0 %v1697
        %2316 = vmatpush.bf16.msra.mxu0 %v1689
        %2317 = vmatpush.bf16.msra.mxu0 %v1681
        %2318 = vmatpush.bf16.msra.mxu0 %v1673
        %2319 = vmatpush.bf16.msra.mxu0 %v1665
        %2320 = vmatpush.bf16.msra.mxu0 %v1657
        %2321 = vmatpush.bf16.msra.mxu0 %v1649
        %2322 = vmatmul.bf16.gmra.mxu0 %v678
        %v2323 = vpop.f32.mrf.mxu0
        %v2324 = vadd.f32 %v2311, %v2323
        %v2325 = vpop.f32.mrf.mxu0
        %2326 = vdwg.mxu0
        %2327 = vmatpush.bf16.msra.mxu0 %v1514
        %2328 = vmatpush.bf16.msra.mxu0 %v1506
        %2329 = vmatpush.bf16.msra.mxu0 %v1498
        %2330 = vmatpush.bf16.msra.mxu0 %v1490
        %2331 = vmatpush.bf16.msra.mxu0 %v1482
        %2332 = vmatpush.bf16.msra.mxu0 %v1474
        %2333 = vmatpush.bf16.msra.mxu0 %v1466
        %2334 = vmatpush.bf16.msra.mxu0 %v1458
        %2335 = vmatmul.bf16.gmra.mxu0 %v675
        %v2336 = vpop.f32.mrf.mxu0
        %v2337 = vadd.f32 0.0, %v2336
        %v2338 = vpop.f32.mrf.mxu0
        %2339 = vdwg.mxu0
        %2340 = vmatpush.bf16.msra.mxu0 %v1578
        %2341 = vmatpush.bf16.msra.mxu0 %v1570
        %2342 = vmatpush.bf16.msra.mxu0 %v1562
        %2343 = vmatpush.bf16.msra.mxu0 %v1554
        %2344 = vmatpush.bf16.msra.mxu0 %v1546
        %2345 = vmatpush.bf16.msra.mxu0 %v1538
        %2346 = vmatpush.bf16.msra.mxu0 %v1530
        %2347 = vmatpush.bf16.msra.mxu0 %v1522
        %2348 = vmatmul.bf16.gmra.mxu0 %v676
        %v2349 = vpop.f32.mrf.mxu0
        %v2350 = vadd.f32 %v2337, %v2349
        %v2351 = vpop.f32.mrf.mxu0
        %2352 = vdwg.mxu0
        %2353 = vmatpush.bf16.msra.mxu0 %v1642
        %2354 = vmatpush.bf16.msra.mxu0 %v1634
        %2355 = vmatpush.bf16.msra.mxu0 %v1626
        %2356 = vmatpush.bf16.msra.mxu0 %v1618
        %2357 = vmatpush.bf16.msra.mxu0 %v1610
        %2358 = vmatpush.bf16.msra.mxu0 %v1602
        %2359 = vmatpush.bf16.msra.mxu0 %v1594
        %2360 = vmatpush.bf16.msra.mxu0 %v1586
        %2361 = vmatmul.bf16.gmra.mxu0 %v677
        %v2362 = vpop.f32.mrf.mxu0
        %v2363 = vadd.f32 %v2350, %v2362
        %v2364 = vpop.f32.mrf.mxu0
        %2365 = vdwg.mxu0
        %2366 = vmatpush.bf16.msra.mxu0 %v1706
        %2367 = vmatpush.bf16.msra.mxu0 %v1698
        %2368 = vmatpush.bf16.msra.mxu0 %v1690
        %2369 = vmatpush.bf16.msra.mxu0 %v1682
        %2370 = vmatpush.bf16.msra.mxu0 %v1674
        %2371 = vmatpush.bf16.msra.mxu0 %v1666
        %2372 = vmatpush.bf16.msra.mxu0 %v1658
        %2373 = vmatpush.bf16.msra.mxu0 %v1650
        %2374 = vmatmul.bf16.gmra.mxu0 %v678
        %v2375 = vpop.f32.mrf.mxu0
        %v2376 = vadd.f32 %v2363, %v2375
        %v2377 = vpop.f32.mrf.mxu0
        %2378 = vdwg.mxu0
        %v2379 = vadd.f32 %v403, %v2012
        %v2380 = vadd.f32 %v404, %v2064
        %v2381 = vadd.f32 %v405, %v2116
        %v2382 = vadd.f32 %v406, %v2168
        %v2383 = vadd.f32 %v407, %v2220
        %v2384 = vadd.f32 %v408, %v2272
        %v2385 = vadd.f32 %v409, %v2324
        %v2386 = vadd.f32 %v410, %v2376
        %2387 = vst [vmem:[#allocation2] sm:$0xff] %v2379
        %2388 = vst [vmem:[#allocation2 + $0x8] sm:$0xff] %v2380
        %2389 = vst [vmem:[#allocation2 + $0x10] sm:$0xff] %v2381
        %2390 = vst [vmem:[#allocation2 + $0x18] sm:$0xff] %v2382
        %2391 = vst [vmem:[#allocation2 + $0x20] sm:$0xff] %v2383
        %2392 = vst [vmem:[#allocation2 + $0x28] sm:$0xff] %v2384
        %2393 = vst [vmem:[#allocation2 + $0x30] sm:$0xff] %v2385
        %2394 = vst [vmem:[#allocation2 + $0x38] sm:$0xff] %v2386
        %p2395 = scmp.eq.s32.totalorder %s27, 1
        // Predicated region
        $region77: #{tpu_custom_call.1} parent=47 // pred_check
          %p2396 = pneg %p2395
        $region78: #{tpu_custom_call.1} parent=47 // pred_check_branch
          %2398 = sbr.rel (%p2396) target = $region80
        $region79: #{tpu_custom_call.1} parent=47 // pred_region
          %v2399 = vld [vmem:[#allocation2] sm:$0xff]
          %v2400 = vld [vmem:[#allocation2 + $0x8] sm:$0xff]
          %v2401 = vld [vmem:[#allocation2 + $0x10] sm:$0xff]
          %v2402 = vld [vmem:[#allocation2 + $0x18] sm:$0xff]
          %v2403 = vld [vmem:[#allocation2 + $0x20] sm:$0xff]
          %v2404 = vld [vmem:[#allocation2 + $0x28] sm:$0xff]
          %v2405 = vld [vmem:[#allocation2 + $0x30] sm:$0xff]
          %v2406 = vld [vmem:[#allocation2 + $0x38] sm:$0xff]
          %v2407 = vld [vmem:[#allocation8] sm:$0xff]
          %v2408 = vunpack.c.l.bf16 %v2407
          %v2409 = vunpack.c.h.bf16 %v2407
          %v2412 = vperm.slane %v2408, 0
          %v2413 = vperm.slane %v2408, 2
          %v2414 = vperm.slane %v2408, 4
          %v2415 = vperm.slane %v2408, 6
          %v2416 = vperm.slane %v2409, 0
          %v2417 = vperm.slane %v2409, 2
          %v2418 = vperm.slane %v2409, 4
          %v2419 = vperm.slane %v2409, 6
          %v2428 = vperm.slane %v2412, 0
          %v2429 = vperm.slane %v2413, 0
          %v2430 = vperm.slane %v2414, 0
          %v2431 = vperm.slane %v2415, 0
          %v2432 = vperm.slane %v2416, 0
          %v2433 = vperm.slane %v2417, 0
          %v2434 = vperm.slane %v2418, 0
          %v2435 = vperm.slane %v2419, 0
          %v2436 = vadd.f32 %v2399, %v2428
          %v2437 = vadd.f32 %v2400, %v2429
          %v2438 = vadd.f32 %v2401, %v2430
          %v2439 = vadd.f32 %v2402, %v2431
          %v2440 = vadd.f32 %v2403, %v2432
          %v2441 = vadd.f32 %v2404, %v2433
          %v2442 = vadd.f32 %v2405, %v2434
          %v2443 = vadd.f32 %v2406, %v2435
          %v2444 = vmax.f32 %v2436, 0.0
          %v2445 = vmax.f32 %v2437, 0.0
          %v2446 = vmax.f32 %v2438, 0.0
          %v2447 = vmax.f32 %v2439, 0.0
          %v2448 = vmax.f32 %v2440, 0.0
          %v2449 = vmax.f32 %v2441, 0.0
          %v2450 = vmax.f32 %v2442, 0.0
          %v2451 = vmax.f32 %v2443, 0.0
          %v2452 = vpack.c.bf16 %v2444, %v2444
          %v2453 = vpack.c.bf16 %v2445, %v2445
          %v2454 = vpack.c.bf16 %v2446, %v2446
          %v2455 = vpack.c.bf16 %v2447, %v2447
          %v2456 = vpack.c.bf16 %v2448, %v2448
          %v2457 = vpack.c.bf16 %v2449, %v2449
          %v2458 = vpack.c.bf16 %v2450, %v2450
          %v2459 = vpack.c.bf16 %v2451, %v2451
          %v2460 = vld [vmem:[%s3] sm:$0xf]
          %v2461 = vld [vmem:[%s3 + $0x4] sm:$0xf]
          %v2462 = vld [vmem:[%s3 + $0x8] sm:$0xf]
          %v2463 = vld [vmem:[%s3 + $0xc] sm:$0xf]
          %v2464 = vld [vmem:[%s3 + $0x10] sm:$0xf]
          %v2465 = vld [vmem:[%s3 + $0x14] sm:$0xf]
          %v2466 = vld [vmem:[%s3 + $0x18] sm:$0xf]
          %v2467 = vld [vmem:[%s3 + $0x1c] sm:$0xf]
          %v2468 = vld [vmem:[%s3 + $0x20] sm:$0xf]
          %v2469 = vld [vmem:[%s3 + $0x24] sm:$0xf]
          %v2470 = vld [vmem:[%s3 + $0x28] sm:$0xf]
          %v2471 = vld [vmem:[%s3 + $0x2c] sm:$0xf]
          %v2472 = vld [vmem:[%s3 + $0x30] sm:$0xf]
          %v2473 = vld [vmem:[%s3 + $0x34] sm:$0xf]
          %v2474 = vld [vmem:[%s3 + $0x38] sm:$0xf]
          %v2475 = vld [vmem:[%s3 + $0x3c] sm:$0xf]
          %v2476 = vld [vmem:[%s3 + $0x40] sm:$0xf]
          %v2477 = vld [vmem:[%s3 + $0x44] sm:$0xf]
          %v2478 = vld [vmem:[%s3 + $0x48] sm:$0xf]
          %v2479 = vld [vmem:[%s3 + $0x4c] sm:$0xf]
          %v2480 = vld [vmem:[%s3 + $0x50] sm:$0xf]
          %v2481 = vld [vmem:[%s3 + $0x54] sm:$0xf]
          %v2482 = vld [vmem:[%s3 + $0x58] sm:$0xf]
          %v2483 = vld [vmem:[%s3 + $0x5c] sm:$0xf]
          %v2484 = vld [vmem:[%s3 + $0x60] sm:$0xf]
          %v2485 = vld [vmem:[%s3 + $0x64] sm:$0xf]
          %v2486 = vld [vmem:[%s3 + $0x68] sm:$0xf]
          %v2487 = vld [vmem:[%s3 + $0x6c] sm:$0xf]
          %v2488 = vld [vmem:[%s3 + $0x70] sm:$0xf]
          %v2489 = vld [vmem:[%s3 + $0x74] sm:$0xf]
          %v2490 = vld [vmem:[%s3 + $0x78] sm:$0xf]
          %v2491 = vld [vmem:[%s3 + $0x7c] sm:$0xf]
          %v2492 = vld [vmem:[%s3 + $0x80] sm:$0xf]
          %v2493 = vld [vmem:[%s3 + $0x84] sm:$0xf]
          %v2494 = vld [vmem:[%s3 + $0x88] sm:$0xf]
          %v2495 = vld [vmem:[%s3 + $0x8c] sm:$0xf]
          %v2496 = vld [vmem:[%s3 + $0x90] sm:$0xf]
          %v2497 = vld [vmem:[%s3 + $0x94] sm:$0xf]
          %v2498 = vld [vmem:[%s3 + $0x98] sm:$0xf]
          %v2499 = vld [vmem:[%s3 + $0x9c] sm:$0xf]
          %v2500 = vld [vmem:[%s3 + $0xa0] sm:$0xf]
          %v2501 = vld [vmem:[%s3 + $0xa4] sm:$0xf]
          %v2502 = vld [vmem:[%s3 + $0xa8] sm:$0xf]
          %v2503 = vld [vmem:[%s3 + $0xac] sm:$0xf]
          %v2504 = vld [vmem:[%s3 + $0xb0] sm:$0xf]
          %v2505 = vld [vmem:[%s3 + $0xb4] sm:$0xf]
          %v2506 = vld [vmem:[%s3 + $0xb8] sm:$0xf]
          %v2507 = vld [vmem:[%s3 + $0xbc] sm:$0xf]
          %v2508 = vld [vmem:[%s3 + $0xc0] sm:$0xf]
          %v2509 = vld [vmem:[%s3 + $0xc4] sm:$0xf]
          %v2510 = vld [vmem:[%s3 + $0xc8] sm:$0xf]
          %v2511 = vld [vmem:[%s3 + $0xcc] sm:$0xf]
          %v2512 = vld [vmem:[%s3 + $0xd0] sm:$0xf]
          %v2513 = vld [vmem:[%s3 + $0xd4] sm:$0xf]
          %v2514 = vld [vmem:[%s3 + $0xd8] sm:$0xf]
          %v2515 = vld [vmem:[%s3 + $0xdc] sm:$0xf]
          %v2516 = vld [vmem:[%s3 + $0xe0] sm:$0xf]
          %v2517 = vld [vmem:[%s3 + $0xe4] sm:$0xf]
          %v2518 = vld [vmem:[%s3 + $0xe8] sm:$0xf]
          %v2519 = vld [vmem:[%s3 + $0xec] sm:$0xf]
          %v2520 = vld [vmem:[%s3 + $0xf0] sm:$0xf]
          %v2521 = vld [vmem:[%s3 + $0xf4] sm:$0xf]
          %v2522 = vld [vmem:[%s3 + $0xf8] sm:$0xf]
          %v2523 = vld [vmem:[%s3 + $0xfc] sm:$0xf]
          %v2524 = vld [vmem:[%s3 + $0x100] sm:$0xf]
          %v2525 = vld [vmem:[%s3 + $0x104] sm:$0xf]
          %v2526 = vld [vmem:[%s3 + $0x108] sm:$0xf]
          %v2527 = vld [vmem:[%s3 + $0x10c] sm:$0xf]
          %v2528 = vld [vmem:[%s3 + $0x110] sm:$0xf]
          %v2529 = vld [vmem:[%s3 + $0x114] sm:$0xf]
          %v2530 = vld [vmem:[%s3 + $0x118] sm:$0xf]
          %v2531 = vld [vmem:[%s3 + $0x11c] sm:$0xf]
          %v2532 = vld [vmem:[%s3 + $0x120] sm:$0xf]
          %v2533 = vld [vmem:[%s3 + $0x124] sm:$0xf]
          %v2534 = vld [vmem:[%s3 + $0x128] sm:$0xf]
          %v2535 = vld [vmem:[%s3 + $0x12c] sm:$0xf]
          %v2536 = vld [vmem:[%s3 + $0x130] sm:$0xf]
          %v2537 = vld [vmem:[%s3 + $0x134] sm:$0xf]
          %v2538 = vld [vmem:[%s3 + $0x138] sm:$0xf]
          %v2539 = vld [vmem:[%s3 + $0x13c] sm:$0xf]
          %v2540 = vld [vmem:[%s3 + $0x140] sm:$0xf]
          %v2541 = vld [vmem:[%s3 + $0x144] sm:$0xf]
          %v2542 = vld [vmem:[%s3 + $0x148] sm:$0xf]
          %v2543 = vld [vmem:[%s3 + $0x14c] sm:$0xf]
          %v2544 = vld [vmem:[%s3 + $0x150] sm:$0xf]
          %v2545 = vld [vmem:[%s3 + $0x154] sm:$0xf]
          %v2546 = vld [vmem:[%s3 + $0x158] sm:$0xf]
          %v2547 = vld [vmem:[%s3 + $0x15c] sm:$0xf]
          %v2548 = vld [vmem:[%s3 + $0x160] sm:$0xf]
          %v2549 = vld [vmem:[%s3 + $0x164] sm:$0xf]
          %v2550 = vld [vmem:[%s3 + $0x168] sm:$0xf]
          %v2551 = vld [vmem:[%s3 + $0x16c] sm:$0xf]
          %v2552 = vld [vmem:[%s3 + $0x170] sm:$0xf]
          %v2553 = vld [vmem:[%s3 + $0x174] sm:$0xf]
          %v2554 = vld [vmem:[%s3 + $0x178] sm:$0xf]
          %v2555 = vld [vmem:[%s3 + $0x17c] sm:$0xf]
          %v2556 = vld [vmem:[%s3 + $0x180] sm:$0xf]
          %v2557 = vld [vmem:[%s3 + $0x184] sm:$0xf]
          %v2558 = vld [vmem:[%s3 + $0x188] sm:$0xf]
          %v2559 = vld [vmem:[%s3 + $0x18c] sm:$0xf]
          %v2560 = vld [vmem:[%s3 + $0x190] sm:$0xf]
          %v2561 = vld [vmem:[%s3 + $0x194] sm:$0xf]
          %v2562 = vld [vmem:[%s3 + $0x198] sm:$0xf]
          %v2563 = vld [vmem:[%s3 + $0x19c] sm:$0xf]
          %v2564 = vld [vmem:[%s3 + $0x1a0] sm:$0xf]
          %v2565 = vld [vmem:[%s3 + $0x1a4] sm:$0xf]
          %v2566 = vld [vmem:[%s3 + $0x1a8] sm:$0xf]
          %v2567 = vld [vmem:[%s3 + $0x1ac] sm:$0xf]
          %v2568 = vld [vmem:[%s3 + $0x1b0] sm:$0xf]
          %v2569 = vld [vmem:[%s3 + $0x1b4] sm:$0xf]
          %v2570 = vld [vmem:[%s3 + $0x1b8] sm:$0xf]
          %v2571 = vld [vmem:[%s3 + $0x1bc] sm:$0xf]
          %v2572 = vld [vmem:[%s3 + $0x1c0] sm:$0xf]
          %v2573 = vld [vmem:[%s3 + $0x1c4] sm:$0xf]
          %v2574 = vld [vmem:[%s3 + $0x1c8] sm:$0xf]
          %v2575 = vld [vmem:[%s3 + $0x1cc] sm:$0xf]
          %v2576 = vld [vmem:[%s3 + $0x1d0] sm:$0xf]
          %v2577 = vld [vmem:[%s3 + $0x1d4] sm:$0xf]
          %v2578 = vld [vmem:[%s3 + $0x1d8] sm:$0xf]
          %v2579 = vld [vmem:[%s3 + $0x1dc] sm:$0xf]
          %v2580 = vld [vmem:[%s3 + $0x1e0] sm:$0xf]
          %v2581 = vld [vmem:[%s3 + $0x1e4] sm:$0xf]
          %v2582 = vld [vmem:[%s3 + $0x1e8] sm:$0xf]
          %v2583 = vld [vmem:[%s3 + $0x1ec] sm:$0xf]
          %v2584 = vld [vmem:[%s3 + $0x1f0] sm:$0xf]
          %v2585 = vld [vmem:[%s3 + $0x1f4] sm:$0xf]
          %v2586 = vld [vmem:[%s3 + $0x1f8] sm:$0xf]
          %v2587 = vld [vmem:[%s3 + $0x1fc] sm:$0xf]
          %v2588 = vld [vmem:[#allocation9] sm:$0x1]
          %v2589 = vunpack.c.l.bf16 %v2588
          %v2590 = vperm.slane %v2589, 0
          %v2719 = vunpack.c.l.b16 %v2460
          %v2720 = vunpack.c.l.b16 %v2461
          %v2721 = vunpack.c.l.b16 %v2462
          %v2722 = vunpack.c.l.b16 %v2463
          %v2723 = vunpack.c.l.b16 %v2464
          %v2724 = vunpack.c.l.b16 %v2465
          %v2725 = vunpack.c.l.b16 %v2466
          %v2726 = vunpack.c.l.b16 %v2467
          %v2727 = vunpack.c.l.b16 %v2468
          %v2728 = vunpack.c.l.b16 %v2469
          %v2729 = vunpack.c.l.b16 %v2470
          %v2730 = vunpack.c.l.b16 %v2471
          %v2731 = vunpack.c.l.b16 %v2472
          %v2732 = vunpack.c.l.b16 %v2473
          %v2733 = vunpack.c.l.b16 %v2474
          %v2734 = vunpack.c.l.b16 %v2475
          %v2735 = vunpack.c.l.b16 %v2476
          %v2736 = vunpack.c.l.b16 %v2477
          %v2737 = vunpack.c.l.b16 %v2478
          %v2738 = vunpack.c.l.b16 %v2479
          %v2739 = vunpack.c.l.b16 %v2480
          %v2740 = vunpack.c.l.b16 %v2481
          %v2741 = vunpack.c.l.b16 %v2482
          %v2742 = vunpack.c.l.b16 %v2483
          %v2743 = vunpack.c.l.b16 %v2484
          %v2744 = vunpack.c.l.b16 %v2485
          %v2745 = vunpack.c.l.b16 %v2486
          %v2746 = vunpack.c.l.b16 %v2487
          %v2747 = vunpack.c.l.b16 %v2488
          %v2748 = vunpack.c.l.b16 %v2489
          %v2749 = vunpack.c.l.b16 %v2490
          %v2750 = vunpack.c.l.b16 %v2491
          %v2751 = vunpack.c.l.b16 %v2492
          %v2752 = vunpack.c.l.b16 %v2493
          %v2753 = vunpack.c.l.b16 %v2494
          %v2754 = vunpack.c.l.b16 %v2495
          %v2755 = vunpack.c.l.b16 %v2496
          %v2756 = vunpack.c.l.b16 %v2497
          %v2757 = vunpack.c.l.b16 %v2498
          %v2758 = vunpack.c.l.b16 %v2499
          %v2759 = vunpack.c.l.b16 %v2500
          %v2760 = vunpack.c.l.b16 %v2501
          %v2761 = vunpack.c.l.b16 %v2502
          %v2762 = vunpack.c.l.b16 %v2503
          %v2763 = vunpack.c.l.b16 %v2504
          %v2764 = vunpack.c.l.b16 %v2505
          %v2765 = vunpack.c.l.b16 %v2506
          %v2766 = vunpack.c.l.b16 %v2507
          %v2767 = vunpack.c.l.b16 %v2508
          %v2768 = vunpack.c.l.b16 %v2509
          %v2769 = vunpack.c.l.b16 %v2510
          %v2770 = vunpack.c.l.b16 %v2511
          %v2771 = vunpack.c.l.b16 %v2512
          %v2772 = vunpack.c.l.b16 %v2513
          %v2773 = vunpack.c.l.b16 %v2514
          %v2774 = vunpack.c.l.b16 %v2515
          %v2775 = vunpack.c.l.b16 %v2516
          %v2776 = vunpack.c.l.b16 %v2517
          %v2777 = vunpack.c.l.b16 %v2518
          %v2778 = vunpack.c.l.b16 %v2519
          %v2779 = vunpack.c.l.b16 %v2520
          %v2780 = vunpack.c.l.b16 %v2521
          %v2781 = vunpack.c.l.b16 %v2522
          %v2782 = vunpack.c.l.b16 %v2523
          %v2783 = vunpack.c.l.b16 %v2524
          %v2784 = vunpack.c.l.b16 %v2525
          %v2785 = vunpack.c.l.b16 %v2526
          %v2786 = vunpack.c.l.b16 %v2527
          %v2787 = vunpack.c.l.b16 %v2528
          %v2788 = vunpack.c.l.b16 %v2529
          %v2789 = vunpack.c.l.b16 %v2530
          %v2790 = vunpack.c.l.b16 %v2531
          %v2791 = vunpack.c.l.b16 %v2532
          %v2792 = vunpack.c.l.b16 %v2533
          %v2793 = vunpack.c.l.b16 %v2534
          %v2794 = vunpack.c.l.b16 %v2535
          %v2795 = vunpack.c.l.b16 %v2536
          %v2796 = vunpack.c.l.b16 %v2537
          %v2797 = vunpack.c.l.b16 %v2538
          %v2798 = vunpack.c.l.b16 %v2539
          %v2799 = vunpack.c.l.b16 %v2540
          %v2800 = vunpack.c.l.b16 %v2541
          %v2801 = vunpack.c.l.b16 %v2542
          %v2802 = vunpack.c.l.b16 %v2543
          %v2803 = vunpack.c.l.b16 %v2544
          %v2804 = vunpack.c.l.b16 %v2545
          %v2805 = vunpack.c.l.b16 %v2546
          %v2806 = vunpack.c.l.b16 %v2547
          %v2807 = vunpack.c.l.b16 %v2548
          %v2808 = vunpack.c.l.b16 %v2549
          %v2809 = vunpack.c.l.b16 %v2550
          %v2810 = vunpack.c.l.b16 %v2551
          %v2811 = vunpack.c.l.b16 %v2552
          %v2812 = vunpack.c.l.b16 %v2553
          %v2813 = vunpack.c.l.b16 %v2554
          %v2814 = vunpack.c.l.b16 %v2555
          %v2815 = vunpack.c.l.b16 %v2556
          %v2816 = vunpack.c.l.b16 %v2557
          %v2817 = vunpack.c.l.b16 %v2558
          %v2818 = vunpack.c.l.b16 %v2559
          %v2819 = vunpack.c.l.b16 %v2560
          %v2820 = vunpack.c.l.b16 %v2561
          %v2821 = vunpack.c.l.b16 %v2562
          %v2822 = vunpack.c.l.b16 %v2563
          %v2823 = vunpack.c.l.b16 %v2564
          %v2824 = vunpack.c.l.b16 %v2565
          %v2825 = vunpack.c.l.b16 %v2566
          %v2826 = vunpack.c.l.b16 %v2567
          %v2827 = vunpack.c.l.b16 %v2568
          %v2828 = vunpack.c.l.b16 %v2569
          %v2829 = vunpack.c.l.b16 %v2570
          %v2830 = vunpack.c.l.b16 %v2571
          %v2831 = vunpack.c.l.b16 %v2572
          %v2832 = vunpack.c.l.b16 %v2573
          %v2833 = vunpack.c.l.b16 %v2574
          %v2834 = vunpack.c.l.b16 %v2575
          %v2835 = vunpack.c.l.b16 %v2576
          %v2836 = vunpack.c.l.b16 %v2577
          %v2837 = vunpack.c.l.b16 %v2578
          %v2838 = vunpack.c.l.b16 %v2579
          %v2839 = vunpack.c.l.b16 %v2580
          %v2840 = vunpack.c.l.b16 %v2581
          %v2841 = vunpack.c.l.b16 %v2582
          %v2842 = vunpack.c.l.b16 %v2583
          %v2843 = vunpack.c.l.b16 %v2584
          %v2844 = vunpack.c.l.b16 %v2585
          %v2845 = vunpack.c.l.b16 %v2586
          %v2846 = vunpack.c.l.b16 %v2587
          %v2847 = vpack.c.b16 %v2720, %v2719
          %v2848 = vpack.c.b16 %v2722, %v2721
          %v2849 = vpack.c.b16 %v2724, %v2723
          %v2850 = vpack.c.b16 %v2726, %v2725
          %v2851 = vpack.c.b16 %v2728, %v2727
          %v2852 = vpack.c.b16 %v2730, %v2729
          %v2853 = vpack.c.b16 %v2732, %v2731
          %v2854 = vpack.c.b16 %v2734, %v2733
          %v2855 = vpack.c.b16 %v2736, %v2735
          %v2856 = vpack.c.b16 %v2738, %v2737
          %v2857 = vpack.c.b16 %v2740, %v2739
          %v2858 = vpack.c.b16 %v2742, %v2741
          %v2859 = vpack.c.b16 %v2744, %v2743
          %v2860 = vpack.c.b16 %v2746, %v2745
          %v2861 = vpack.c.b16 %v2748, %v2747
          %v2862 = vpack.c.b16 %v2750, %v2749
          %v2863 = vpack.c.b16 %v2752, %v2751
          %v2864 = vpack.c.b16 %v2754, %v2753
          %v2865 = vpack.c.b16 %v2756, %v2755
          %v2866 = vpack.c.b16 %v2758, %v2757
          %v2867 = vpack.c.b16 %v2760, %v2759
          %v2868 = vpack.c.b16 %v2762, %v2761
          %v2869 = vpack.c.b16 %v2764, %v2763
          %v2870 = vpack.c.b16 %v2766, %v2765
          %v2871 = vpack.c.b16 %v2768, %v2767
          %v2872 = vpack.c.b16 %v2770, %v2769
          %v2873 = vpack.c.b16 %v2772, %v2771
          %v2874 = vpack.c.b16 %v2774, %v2773
          %v2875 = vpack.c.b16 %v2776, %v2775
          %v2876 = vpack.c.b16 %v2778, %v2777
          %v2877 = vpack.c.b16 %v2780, %v2779
          %v2878 = vpack.c.b16 %v2782, %v2781
          %v2879 = vpack.c.b16 %v2784, %v2783
          %v2880 = vpack.c.b16 %v2786, %v2785
          %v2881 = vpack.c.b16 %v2788, %v2787
          %v2882 = vpack.c.b16 %v2790, %v2789
          %v2883 = vpack.c.b16 %v2792, %v2791
          %v2884 = vpack.c.b16 %v2794, %v2793
          %v2885 = vpack.c.b16 %v2796, %v2795
          %v2886 = vpack.c.b16 %v2798, %v2797
          %v2887 = vpack.c.b16 %v2800, %v2799
          %v2888 = vpack.c.b16 %v2802, %v2801
          %v2889 = vpack.c.b16 %v2804, %v2803
          %v2890 = vpack.c.b16 %v2806, %v2805
          %v2891 = vpack.c.b16 %v2808, %v2807
          %v2892 = vpack.c.b16 %v2810, %v2809
          %v2893 = vpack.c.b16 %v2812, %v2811
          %v2894 = vpack.c.b16 %v2814, %v2813
          %v2895 = vpack.c.b16 %v2816, %v2815
          %v2896 = vpack.c.b16 %v2818, %v2817
          %v2897 = vpack.c.b16 %v2820, %v2819
          %v2898 = vpack.c.b16 %v2822, %v2821
          %v2899 = vpack.c.b16 %v2824, %v2823
          %v2900 = vpack.c.b16 %v2826, %v2825
          %v2901 = vpack.c.b16 %v2828, %v2827
          %v2902 = vpack.c.b16 %v2830, %v2829
          %v2903 = vpack.c.b16 %v2832, %v2831
          %v2904 = vpack.c.b16 %v2834, %v2833
          %v2905 = vpack.c.b16 %v2836, %v2835
          %v2906 = vpack.c.b16 %v2838, %v2837
          %v2907 = vpack.c.b16 %v2840, %v2839
          %v2908 = vpack.c.b16 %v2842, %v2841
          %v2909 = vpack.c.b16 %v2844, %v2843
          %v2910 = vpack.c.b16 %v2846, %v2845
          %2975 = vmatpush.bf16.msra.mxu0 %v2854
          %2976 = vmatpush.bf16.msra.mxu0 %v2853
          %2977 = vmatpush.bf16.msra.mxu0 %v2852
          %2978 = vmatpush.bf16.msra.mxu0 %v2851
          %2979 = vmatpush.bf16.msra.mxu0 %v2850
          %2980 = vmatpush.bf16.msra.mxu0 %v2849
          %2981 = vmatpush.bf16.msra.mxu0 %v2848
          %2982 = vmatpush.bf16.msra.mxu0 %v2847
          %2983 = vmatmul.bf16.gmra.mxu0 %v2452
          %v2984 = vpop.f32.mrf.mxu0
          %v2985 = vadd.f32 %v2590, %v2984
          %v2986 = vpop.f32.mrf.mxu0
          %2987 = vdwg.mxu0
          %2988 = vmatpush.bf16.msra.mxu0 %v2862
          %2989 = vmatpush.bf16.msra.mxu0 %v2861
          %2990 = vmatpush.bf16.msra.mxu0 %v2860
          %2991 = vmatpush.bf16.msra.mxu0 %v2859
          %2992 = vmatpush.bf16.msra.mxu0 %v2858
          %2993 = vmatpush.bf16.msra.mxu0 %v2857
          %2994 = vmatpush.bf16.msra.mxu0 %v2856
          %2995 = vmatpush.bf16.msra.mxu0 %v2855
          %2996 = vmatmul.bf16.gmra.mxu0 %v2453
          %v2997 = vpop.f32.mrf.mxu0
          %v2998 = vadd.f32 %v2985, %v2997
          %v2999 = vpop.f32.mrf.mxu0
          %3000 = vdwg.mxu0
          %3001 = vmatpush.bf16.msra.mxu0 %v2870
          %3002 = vmatpush.bf16.msra.mxu0 %v2869
          %3003 = vmatpush.bf16.msra.mxu0 %v2868
          %3004 = vmatpush.bf16.msra.mxu0 %v2867
          %3005 = vmatpush.bf16.msra.mxu0 %v2866
          %3006 = vmatpush.bf16.msra.mxu0 %v2865
          %3007 = vmatpush.bf16.msra.mxu0 %v2864
          %3008 = vmatpush.bf16.msra.mxu0 %v2863
          %3009 = vmatmul.bf16.gmra.mxu0 %v2454
          %v3010 = vpop.f32.mrf.mxu0
          %v3011 = vadd.f32 %v2998, %v3010
          %v3012 = vpop.f32.mrf.mxu0
          %3013 = vdwg.mxu0
          %3014 = vmatpush.bf16.msra.mxu0 %v2878
          %3015 = vmatpush.bf16.msra.mxu0 %v2877
          %3016 = vmatpush.bf16.msra.mxu0 %v2876
          %3017 = vmatpush.bf16.msra.mxu0 %v2875
          %3018 = vmatpush.bf16.msra.mxu0 %v2874
          %3019 = vmatpush.bf16.msra.mxu0 %v2873
          %3020 = vmatpush.bf16.msra.mxu0 %v2872
          %3021 = vmatpush.bf16.msra.mxu0 %v2871
          %3022 = vmatmul.bf16.gmra.mxu0 %v2455
          %v3023 = vpop.f32.mrf.mxu0
          %v3024 = vadd.f32 %v3011, %v3023
          %v3025 = vpop.f32.mrf.mxu0
          %3026 = vdwg.mxu0
          %3027 = vmatpush.bf16.msra.mxu0 %v2886
          %3028 = vmatpush.bf16.msra.mxu0 %v2885
          %3029 = vmatpush.bf16.msra.mxu0 %v2884
          %3030 = vmatpush.bf16.msra.mxu0 %v2883
          %3031 = vmatpush.bf16.msra.mxu0 %v2882
          %3032 = vmatpush.bf16.msra.mxu0 %v2881
          %3033 = vmatpush.bf16.msra.mxu0 %v2880
          %3034 = vmatpush.bf16.msra.mxu0 %v2879
          %3035 = vmatmul.bf16.gmra.mxu0 %v2456
          %v3036 = vpop.f32.mrf.mxu0
          %v3037 = vadd.f32 %v3024, %v3036
          %v3038 = vpop.f32.mrf.mxu0
          %3039 = vdwg.mxu0
          %3040 = vmatpush.bf16.msra.mxu0 %v2894
          %3041 = vmatpush.bf16.msra.mxu0 %v2893
          %3042 = vmatpush.bf16.msra.mxu0 %v2892
          %3043 = vmatpush.bf16.msra.mxu0 %v2891
          %3044 = vmatpush.bf16.msra.mxu0 %v2890
          %3045 = vmatpush.bf16.msra.mxu0 %v2889
          %3046 = vmatpush.bf16.msra.mxu0 %v2888
          %3047 = vmatpush.bf16.msra.mxu0 %v2887
          %3048 = vmatmul.bf16.gmra.mxu0 %v2457
          %v3049 = vpop.f32.mrf.mxu0
          %v3050 = vadd.f32 %v3037, %v3049
          %v3051 = vpop.f32.mrf.mxu0
          %3052 = vdwg.mxu0
          %3053 = vmatpush.bf16.msra.mxu0 %v2902
          %3054 = vmatpush.bf16.msra.mxu0 %v2901
          %3055 = vmatpush.bf16.msra.mxu0 %v2900
          %3056 = vmatpush.bf16.msra.mxu0 %v2899
          %3057 = vmatpush.bf16.msra.mxu0 %v2898
          %3058 = vmatpush.bf16.msra.mxu0 %v2897
          %3059 = vmatpush.bf16.msra.mxu0 %v2896
          %3060 = vmatpush.bf16.msra.mxu0 %v2895
          %3061 = vmatmul.bf16.gmra.mxu0 %v2458
          %v3062 = vpop.f32.mrf.mxu0
          %v3063 = vadd.f32 %v3050, %v3062
          %v3064 = vpop.f32.mrf.mxu0
          %3065 = vdwg.mxu0
          %3066 = vmatpush.bf16.msra.mxu0 %v2910
          %3067 = vmatpush.bf16.msra.mxu0 %v2909
          %3068 = vmatpush.bf16.msra.mxu0 %v2908
          %3069 = vmatpush.bf16.msra.mxu0 %v2907
          %3070 = vmatpush.bf16.msra.mxu0 %v2906
          %3071 = vmatpush.bf16.msra.mxu0 %v2905
          %3072 = vmatpush.bf16.msra.mxu0 %v2904
          %3073 = vmatpush.bf16.msra.mxu0 %v2903
          %3074 = vmatmul.bf16.gmra.mxu0 %v2459
          %v3075 = vpop.f32.mrf.mxu0
          %v3076 = vadd.f32 %v3063, %v3075
          %v3077 = vpop.f32.mrf.mxu0
          %3078 = vdwg.mxu0
          %v3079 = vmax.f32 %v3076, 0.0
          %v3080 = vpack.c.bf16 %v3079, %v3079
          %v3081 = vld [vmem:[#allocation11] sm:$0xf]
          %v3082 = vld [vmem:[#allocation11 + $0x4] sm:$0xf]
          %v3083 = vld [vmem:[#allocation11 + $0x8] sm:$0xf]
          %v3084 = vld [vmem:[#allocation11 + $0xc] sm:$0xf]
          %v3085 = vld [vmem:[#allocation11 + $0x10] sm:$0xf]
          %v3086 = vld [vmem:[#allocation11 + $0x14] sm:$0xf]
          %v3087 = vld [vmem:[#allocation11 + $0x18] sm:$0xf]
          %v3088 = vld [vmem:[#allocation11 + $0x1c] sm:$0xf]
          %v3089 = vld [vmem:[#allocation12] sm:$0x1]
          %v3090 = vunpack.c.l.bf16 %v3089
          %v3091 = vperm.slane %v3090, 0
          %v3100 = vunpack.c.l.b16 %v3081
          %v3101 = vunpack.c.l.b16 %v3082
          %v3102 = vunpack.c.l.b16 %v3083
          %v3103 = vunpack.c.l.b16 %v3084
          %v3104 = vunpack.c.l.b16 %v3085
          %v3105 = vunpack.c.l.b16 %v3086
          %v3106 = vunpack.c.l.b16 %v3087
          %v3107 = vunpack.c.l.b16 %v3088
          %v3108 = vpack.c.b16 %v3101, %v3100
          %v3109 = vpack.c.b16 %v3103, %v3102
          %v3110 = vpack.c.b16 %v3105, %v3104
          %v3111 = vpack.c.b16 %v3107, %v3106
          %vm3116 = vcmask 523264
          %v3118 = vsel %vm3116, %v3080, 0
          %3120 = vmatpush.bf16.msra.mxu0 0
          %3121 = vmatpush.bf16.msra.mxu0 0
          %3122 = vmatpush.bf16.msra.mxu0 0
          %3123 = vmatpush.bf16.msra.mxu0 0
          %3124 = vmatpush.bf16.msra.mxu0 %v3111
          %3125 = vmatpush.bf16.msra.mxu0 %v3110
          %3126 = vmatpush.bf16.msra.mxu0 %v3109
          %3127 = vmatpush.bf16.msra.mxu0 %v3108
          %3128 = vmatmul.bf16.gmra.mxu0 %v3118
          %v3129 = vpop.f32.mrf.mxu0
          %v3130 = vadd.f32 %v3091, %v3129
          %v3131 = vpop.f32.mrf.mxu0
          %3132 = vdwg.mxu0
          %3133 = vst [vmem:[#allocation14] sm:$0xff] %v3130
        $region80: #{tpu_custom_call.1} parent=47 // pred_fallthru
          _
        // Predicated region
        $region81: #{tpu_custom_call.1} parent=47 // pred_check
          %p3134 = pneg %p197
        $region82: #{tpu_custom_call.1} parent=47 // pred_check_branch
          %3136 = sbr.rel (%p3134) target = $region84
        $region83: #{tpu_custom_call.1} parent=47 // pred_region
          %3138 = vsyncadd [#allocation5], 0
          %s3140 = sshll.u32 [#allocation14], 4
          %s3141 = int_to_ptr.vmem [resolvable:$true] %s3140
          %s3142 = sshll.u32 %s7, 4
          %s3143 = int_to_ptr.hbm [resolvable:$true] %s3142
          %3145 = dma.vmem_to_hbm [thread:$0]  %s3141, 128, %s3143, [#allocation5]
        $region84: #{tpu_custom_call.1} parent=47 // pred_fallthru
          _
        // Predicated region
        $region85: #{tpu_custom_call.1} parent=47 // pred_check
          %p3146 = pneg %p197
        $region86: #{tpu_custom_call.1} parent=47 // pred_check_branch
          %3148 = sbr.rel (%p3146) target = $region88
        $region87: #{tpu_custom_call.1} parent=47 // pred_region
          %3150 = dma.done [#allocation5], 128
        $region88: #{tpu_custom_call.1} parent=47 // pred_fallthru
          _
      $region48: #{tpu_custom_call.1} parent=5 // pred_fallthru
        _
      %p3151 = scmp.le.s32.totalorder 2, %s22
      // Predicated region
      $region89: #{tpu_custom_call.1} parent=5 // pred_check
        %p3152 = pneg %p3151
      $region90: #{tpu_custom_call.1} parent=5 // pred_check_branch
        %3154 = sbr.rel (%p3152) target = $region92
      $region91: #{tpu_custom_call.1} parent=5 // pred_region
        %s3155 = ssub.s32 %s22, 2
      $region92: #{tpu_custom_call.1} parent=5 // pred_fallthru
        _
    $region6: #{tpu_custom_call.1} parent=1 // loop_footer
      %s26 = sadd.s32 1, %s22
    $region7: #{tpu_custom_call.1} parent=1 // loop_footer_branch
      %21 = sbr.rel target = $region3
    $region8: #{tpu_custom_call.1} parent=1 // loop_exit
      _
    %3156 = vsyncpa [#allocation4], 1
    %s3157 = scalar_lea.sflag [#allocation4], 1
    %3158 = vsyncpa %s3157, 1
    %3159 = vsyncpa [#allocation7], 1
    %s3160 = scalar_lea.sflag [#allocation7], 1
    %3161 = vsyncpa %s3160, 1
    %3162 = vsyncpa [#allocation10], 1
    %3163 = vsyncpa [#allocation13], 1
    %3164 = vsyncpa [#allocation5], 1
    %s3165 = scalar_lea.sflag [#allocation5], 1
    %3166 = vsyncpa %s3165, 1

</llo_original>
